<compile_context>
chip_gen: v7x
topology: tpu7x:2x2x1
jax: 0.10.0
libtpu: 0.0.40
codegen_flags: <defaults>
</compile_context>

<pallas_src>
import jax
import jax.numpy as jnp
from jax.experimental import pallas as pl
from jax.experimental.pallas import tpu as pltpu

# ----------------------------- configuration -----------------------------
K = 3                      # 1 pretrained + 2 task vectors (len(paramslist))
B, C, H, W = 2, 4, 16, 16  # input images, NCHW
D_IN = C * H * W           # 1024
D_HID = 128
D_FEAT = 128
N_CLASSES = 16
EXAM_DATASETS = ["EuroSAT", "DTD"]
N_DS = len(EXAM_DATASETS)

SUBLANES = 8
LANES = 128
B_PAD = ((B + SUBLANES - 1) // SUBLANES) * SUBLANES          # 8   (sublane-full batch)
HEAD_PAD = ((N_CLASSES + LANES - 1) // LANES) * LANES        # 128 (per-dataset lane pad)
HEAD_ALL = N_DS * HEAD_PAD                                   # 256 (fills 256-wide MXU)

ENCODER_SHAPES = [("w1", (D_IN, D_HID)), ("b1", (1, D_HID)),
                  ("w2", (D_HID, D_FEAT)), ("b2", (1, D_FEAT))]


# ------------- Pallas kernel: fused merge + encoder + classifiers ----------
def _fused_forward_kernel(lam_ref, x_ref, w1_ref, b1_ref, w2_ref, b2_ref,
                          wc_ref, bc_ref, o_ref):
    # lam_ref : SMEM (K,) f32
    # x_ref   : VMEM (B_PAD, D_IN)
    # w1_ref  : VMEM (K*D_IN, D_HID)    task-stacked along the contraction dim
    # b1_ref  : VMEM (K, 1, D_HID)
    # w2_ref  : VMEM (K*D_HID, D_FEAT)  task-stacked along the contraction dim
    # b2_ref  : VMEM (K, 1, D_FEAT)
    # wc_ref  : VMEM (D_FEAT, HEAD_ALL) all dataset heads, lane-dense
    # bc_ref  : VMEM (1, HEAD_ALL)
    # o_ref   : VMEM (B_PAD, HEAD_ALL)  lane-dense output slab
    lam = [lam_ref[k] for k in range(K)]          # read scalars once from SMEM

    def merge_bias(b_ref):                        # tiny: K vregs of VPU work
        acc = lam[0] * b_ref[0]
        for k in range(1, K):
            acc = acc + lam[k] * b_ref[k]
        return acc                                # (1, D)

    # ---- layer 1: merge folded into the MXU contraction ------------------
    x = x_ref[...]                                                   # (B_PAD, D_IN)
    x_scaled = jnp.concatenate([lam[k] * x for k in range(K)], axis=1)  # (B_PAD, K*D_IN)
    h = jnp.dot(x_scaled, w1_ref[...],
                preferred_element_type=jnp.float32) + merge_bias(b1_ref)
    h = jnp.maximum(h, 0.0)                                          # (B_PAD, D_HID)

    # ---- layer 2: same trick ---------------------------------------------
    h_scaled = jnp.concatenate([lam[k] * h for k in range(K)], axis=1)  # (B_PAD, K*D_HID)
    feat = jnp.dot(h_scaled, w2_ref[...],
                   preferred_element_type=jnp.float32) + merge_bias(b2_ref)

    # ---- all classifier heads in one 256-wide MXU pass ---------------------
    out = jnp.dot(feat, wc_ref[...], preferred_element_type=jnp.float32)
    o_ref[...] = out + bc_ref[...]


def fused_forward(lambdas_k, x_pad, w1_flat, b1s, w2_flat, b2s, wc_all, bc_all):
    """Single-block fused forward: activation-scaled merge + 2 encoder matmuls
    + all classifier heads in one pallas_call (~2 MiB f32 VMEM-resident)."""
    vmem = pl.BlockSpec(memory_space=pltpu.MemorySpace.VMEM)
    return pl.pallas_call(
        _fused_forward_kernel,
        out_shape=jax.ShapeDtypeStruct((B_PAD, HEAD_ALL), jnp.float32),
        in_specs=[pl.BlockSpec(memory_space=pltpu.MemorySpace.SMEM)]   # lambdas
                 + [vmem] * 7,
        out_specs=vmem,
    )(lambdas_k, x_pad, w1_flat, b1s, w2_flat, b2s, wc_all, bc_all)


# --------------------------- AdaMerging wrapper ---------------------------
class AdaMergingPallas:
    def __init__(self, paramslist, classifier_heads):
        # paramslist: list of K encoder-param dicts (pretrained + task models)
        self.paramslist = paramslist

        # Task-stacked weights flattened once along the contraction dim so the
        # lambda-merge rides the MXU:  [W_0; W_1; ...; W_{K-1}]
        self.w1_flat = jnp.concatenate([p["w1"] for p in paramslist], axis=0)  # (K*D_IN, D_HID)
        self.w2_flat = jnp.concatenate([p["w2"] for p in paramslist], axis=0)  # (K*D_HID, D_FEAT)
        self.b1_stack = jnp.stack([p["b1"] for p in paramslist])               # (K, 1, D_HID)
        self.b2_stack = jnp.stack([p["b2"] for p in paramslist])               # (K, 1, D_FEAT)
        # kept only for the pure-JAX reference
        self.w1_stack = jnp.stack([p["w1"] for p in paramslist])
        self.w2_stack = jnp.stack([p["w2"] for p in paramslist])

        # pretrain lambda fixed at 1.0, task lambdas trainable, prior = 0.3
        self.pretrain_lambdas = jnp.ones((1, 1), jnp.float32)
        self.lambdas_raw = jnp.ones((1, K - 1), jnp.float32) * 0.3
        # TODO(synk): training lambdas needs a custom VJP through pallas_call.

        # per-dataset heads (not merged); pad + concat ONCE into a single
        # lane-dense (D_FEAT, 256) slab -> one MXU pass evaluates every head.
        self.classifier_heads = classifier_heads
        self.head_offset = {}
        wc_cols, bc_cols = [], []
        for i, name in enumerate(EXAM_DATASETS):
            wc, bc = classifier_heads[name]
            wc_cols.append(jnp.pad(wc, ((0, 0), (0, HEAD_PAD - wc.shape[1]))))
            bc_cols.append(jnp.pad(bc, ((0, 0), (0, HEAD_PAD - bc.shape[1]))))
            self.head_offset[name] = i * HEAD_PAD
        self.wc_all = jnp.concatenate(wc_cols, axis=1)   # (D_FEAT, HEAD_ALL)
        self.bc_all = jnp.concatenate(bc_cols, axis=1)   # (1, HEAD_ALL)

    def lambdas(self):
        task_lambdas = jnp.clip(self.lambdas_raw, 0.0, 1.0)
        return jnp.concatenate((self.pretrain_lambdas, task_lambdas), axis=1)

    def forward(self, inp, dataset_name):
        # inp: NCHW (B, C, H, W) float32
        alph = self.lambdas()[0]                            # (K,)
        x = inp.reshape(inp.shape[0], -1)                   # NCHW flatten
        nb = x.shape[0]
        x_pad = jnp.pad(x, ((0, B_PAD - nb), (0, 0)))       # full 8-sublane batch
        out_all = fused_forward(alph, x_pad,
                                self.w1_flat, self.b1_stack,
                                self.w2_flat, self.b2_stack,
                                self.wc_all, self.bc_all)    # (B_PAD, HEAD_ALL)
        off = self.head_offset[dataset_name]
        return out_all[:nb, off:off + N_CLASSES]


# ------------------------------ reference ---------------------------------
def forward_ref(module, inp, dataset_name):
    alph = module.lambdas()[0]
    w1 = jnp.einsum("k,kio->io", alph, module.w1_stack)
    b1 = jnp.einsum("k,kio->io", alph, module.b1_stack)
    w2 = jnp.einsum("k,kio->io", alph, module.w2_stack)
    b2 = jnp.einsum("k,kio->io", alph, module.b2_stack)
    x = inp.reshape(inp.shape[0], -1)
    h = jnp.maximum(x @ w1 + b1, 0.0)
    feature = h @ w2 + b2
    wc, bc = module.classifier_heads[dataset_name]
    return feature @ wc + bc


# --------------------------------- main ------------------------------------
if __name__ == "__main__":
    key = jax.random.PRNGKey(0)

    # K encoder parameter sets (deterministic synthetic init)
    paramslist = []
    for k in range(K):
        pdict = {}
        for name, shp in ENCODER_SHAPES:
            key, sub = jax.random.split(key)
            pdict[name] = jax.random.normal(sub, shp, jnp.float32) * 0.02
        paramslist.append(pdict)

    # per-dataset classification heads (not merged)
    classifier_heads = {}
    for ds in EXAM_DATASETS:
        key, kw, kb = jax.random.split(key, 3)
        wc = jax.random.normal(kw, (D_FEAT, N_CLASSES), jnp.float32) * 0.02
        bc = jax.random.normal(kb, (1, N_CLASSES), jnp.float32) * 0.02
        classifier_heads[ds] = (wc, bc)

    module = AdaMergingPallas(paramslist, classifier_heads)

    key, kx = jax.random.split(key)
    inp = jax.random.normal(kx, (B, C, H, W), jnp.float32)  # NCHW

    out = module.forward(inp, "EuroSAT")
    out = jax.block_until_ready(out)

    ref = forward_ref(module, inp, "EuroSAT")
    assert out.shape == (B, N_CLASSES)
    assert jnp.allclose(out, ref, atol=1e-4, rtol=1e-4), (out, ref)

    # also exercise the second head, as the module supports multiple datasets
    out2 = jax.block_until_ready(module.forward(inp, "DTD"))
    ref2 = forward_ref(module, inp, "DTD")
    assert jnp.allclose(out2, ref2, atol=1e-4, rtol=1e-4)

    print("KERNEL_OK")
</pallas_src>

<mosaic_0001>
module attributes {stable_mosaic.version = 11 : i64} {
  func.func @_fused_forward_kernel(%arg0: memref<3xf32, #tpu.memory_space<smem>>, %arg1: memref<8x1024xf32, #tpu.memory_space<vmem>>, %arg2: memref<3072x128xf32, #tpu.memory_space<vmem>>, %arg3: memref<3x1x128xf32, #tpu.memory_space<vmem>>, %arg4: memref<384x128xf32, #tpu.memory_space<vmem>>, %arg5: memref<3x1x128xf32, #tpu.memory_space<vmem>>, %arg6: memref<128x256xf32, #tpu.memory_space<vmem>>, %arg7: memref<1x256xf32, #tpu.memory_space<vmem>>, %arg8: memref<8x256xf32, #tpu.memory_space<vmem>>) attributes {dimension_semantics = [], scalar_prefetch = 0 : i64, scratch_operands = 0 : i64, tpu.core_type = #tpu.core_type<tc>} {
    %c0 = arith.constant 0 : index
    %0 = memref.load %arg0[%c0] : memref<3xf32, #tpu.memory_space<smem>>
    %c1 = arith.constant 1 : index
    %1 = memref.load %arg0[%c1] : memref<3xf32, #tpu.memory_space<smem>>
    %c2 = arith.constant 2 : index
    %2 = memref.load %arg0[%c2] : memref<3xf32, #tpu.memory_space<smem>>
    %c0_0 = arith.constant 0 : index
    %c0_1 = arith.constant 0 : index
    %3 = vector.load %arg1[%c0_0, %c0_1] : memref<8x1024xf32, #tpu.memory_space<vmem>>, vector<8x1024xf32>
    %4 = vector.broadcast %0 : f32 to vector<8x1024xf32>
    %5 = arith.mulf %4, %3 : vector<8x1024xf32>
    %6 = vector.broadcast %1 : f32 to vector<8x1024xf32>
    %7 = arith.mulf %6, %3 : vector<8x1024xf32>
    %8 = vector.broadcast %2 : f32 to vector<8x1024xf32>
    %9 = arith.mulf %8, %3 : vector<8x1024xf32>
    %10 = tpu.concatenate %5, %7, %9 in 1 : vector<8x1024xf32>, vector<8x1024xf32>, vector<8x1024xf32> -> vector<8x3072xf32>
    %c0_2 = arith.constant 0 : index
    %c0_3 = arith.constant 0 : index
    %11 = vector.load %arg2[%c0_2, %c0_3] : memref<3072x128xf32, #tpu.memory_space<vmem>>, vector<3072x128xf32>
    %cst = arith.constant dense<0.000000e+00> : vector<8x128xf32>
    %12 = tpu.matmul %10, %11, %cst {dimension_numbers = #tpu.dot_dimension_numbers<[1], [0], [0], [1], [0, 0, 1, 1], [], []>} : vector<8x3072xf32>, vector<3072x128xf32>, vector<8x128xf32> -> vector<8x128xf32>
    %c0_4 = arith.constant 0 : index
    %c0_5 = arith.constant 0 : index
    %c0_6 = arith.constant 0 : index
    %13 = vector.load %arg3[%c0_4, %c0_5, %c0_6] : memref<3x1x128xf32, #tpu.memory_space<vmem>>, vector<1x1x128xf32>
    %14 = vector.shape_cast %13 : vector<1x1x128xf32> to vector<1x128xf32>
    %15 = vector.broadcast %0 : f32 to vector<1x128xf32>
    %16 = arith.mulf %15, %14 : vector<1x128xf32>
    %c1_7 = arith.constant 1 : index
    %c0_8 = arith.constant 0 : index
    %c0_9 = arith.constant 0 : index
    %17 = vector.load %arg3[%c1_7, %c0_8, %c0_9] : memref<3x1x128xf32, #tpu.memory_space<vmem>>, vector<1x1x128xf32>
    %18 = vector.shape_cast %17 : vector<1x1x128xf32> to vector<1x128xf32>
    %19 = vector.broadcast %1 : f32 to vector<1x128xf32>
    %20 = arith.mulf %19, %18 : vector<1x128xf32>
    %21 = arith.addf %16, %20 : vector<1x128xf32>
    %c2_10 = arith.constant 2 : index
    %c0_11 = arith.constant 0 : index
    %c0_12 = arith.constant 0 : index
    %22 = vector.load %arg3[%c2_10, %c0_11, %c0_12] : memref<3x1x128xf32, #tpu.memory_space<vmem>>, vector<1x1x128xf32>
    %23 = vector.shape_cast %22 : vector<1x1x128xf32> to vector<1x128xf32>
    %24 = vector.broadcast %2 : f32 to vector<1x128xf32>
    %25 = arith.mulf %24, %23 : vector<1x128xf32>
    %26 = arith.addf %21, %25 : vector<1x128xf32>
    %27 = vector.broadcast %26 : vector<1x128xf32> to vector<8x128xf32>
    %28 = arith.addf %12, %27 : vector<8x128xf32>
    %cst_13 = arith.constant 0.000000e+00 : f32
    %29 = vector.broadcast %cst_13 : f32 to vector<8x128xf32>
    %30 = arith.maximumf %28, %29 : vector<8x128xf32>
    %31 = vector.broadcast %0 : f32 to vector<8x128xf32>
    %32 = arith.mulf %31, %30 : vector<8x128xf32>
    %33 = vector.broadcast %1 : f32 to vector<8x128xf32>
    %34 = arith.mulf %33, %30 : vector<8x128xf32>
    %35 = vector.broadcast %2 : f32 to vector<8x128xf32>
    %36 = arith.mulf %35, %30 : vector<8x128xf32>
    %37 = tpu.concatenate %32, %34, %36 in 1 : vector<8x128xf32>, vector<8x128xf32>, vector<8x128xf32> -> vector<8x384xf32>
    %c0_14 = arith.constant 0 : index
    %c0_15 = arith.constant 0 : index
    %38 = vector.load %arg4[%c0_14, %c0_15] : memref<384x128xf32, #tpu.memory_space<vmem>>, vector<384x128xf32>
    %cst_16 = arith.constant dense<0.000000e+00> : vector<8x128xf32>
    %39 = tpu.matmul %37, %38, %cst_16 {dimension_numbers = #tpu.dot_dimension_numbers<[1], [0], [0], [1], [0, 0, 1, 1], [], []>} : vector<8x384xf32>, vector<384x128xf32>, vector<8x128xf32> -> vector<8x128xf32>
    %c0_17 = arith.constant 0 : index
    %c0_18 = arith.constant 0 : index
    %c0_19 = arith.constant 0 : index
    %40 = vector.load %arg5[%c0_17, %c0_18, %c0_19] : memref<3x1x128xf32, #tpu.memory_space<vmem>>, vector<1x1x128xf32>
    %41 = vector.shape_cast %40 : vector<1x1x128xf32> to vector<1x128xf32>
    %42 = vector.broadcast %0 : f32 to vector<1x128xf32>
    %43 = arith.mulf %42, %41 : vector<1x128xf32>
    %c1_20 = arith.constant 1 : index
    %c0_21 = arith.constant 0 : index
    %c0_22 = arith.constant 0 : index
    %44 = vector.load %arg5[%c1_20, %c0_21, %c0_22] : memref<3x1x128xf32, #tpu.memory_space<vmem>>, vector<1x1x128xf32>
    %45 = vector.shape_cast %44 : vector<1x1x128xf32> to vector<1x128xf32>
    %46 = vector.broadcast %1 : f32 to vector<1x128xf32>
    %47 = arith.mulf %46, %45 : vector<1x128xf32>
    %48 = arith.addf %43, %47 : vector<1x128xf32>
    %c2_23 = arith.constant 2 : index
    %c0_24 = arith.constant 0 : index
    %c0_25 = arith.constant 0 : index
    %49 = vector.load %arg5[%c2_23, %c0_24, %c0_25] : memref<3x1x128xf32, #tpu.memory_space<vmem>>, vector<1x1x128xf32>
    %50 = vector.shape_cast %49 : vector<1x1x128xf32> to vector<1x128xf32>
    %51 = vector.broadcast %2 : f32 to vector<1x128xf32>
    %52 = arith.mulf %51, %50 : vector<1x128xf32>
    %53 = arith.addf %48, %52 : vector<1x128xf32>
    %54 = vector.broadcast %53 : vector<1x128xf32> to vector<8x128xf32>
    %55 = arith.addf %39, %54 : vector<8x128xf32>
    %c0_26 = arith.constant 0 : index
    %c0_27 = arith.constant 0 : index
    %56 = vector.load %arg6[%c0_26, %c0_27] : memref<128x256xf32, #tpu.memory_space<vmem>>, vector<128x256xf32>
    %cst_28 = arith.constant dense<0.000000e+00> : vector<8x256xf32>
    %57 = tpu.matmul %55, %56, %cst_28 {dimension_numbers = #tpu.dot_dimension_numbers<[1], [0], [0], [1], [0, 0, 1, 1], [], []>} : vector<8x128xf32>, vector<128x256xf32>, vector<8x256xf32> -> vector<8x256xf32>
    %c0_29 = arith.constant 0 : index
    %c0_30 = arith.constant 0 : index
    %58 = vector.load %arg7[%c0_29, %c0_30] : memref<1x256xf32, #tpu.memory_space<vmem>>, vector<1x256xf32>
    %59 = vector.broadcast %58 : vector<1x256xf32> to vector<8x256xf32>
    %60 = arith.addf %57, %59 : vector<8x256xf32>
    %c0_31 = arith.constant 0 : index
    %c0_32 = arith.constant 0 : index
    %61 = vector.load %arg8[%c0_31, %c0_32] : memref<8x256xf32, #tpu.memory_space<vmem>>, vector<8x256xf32>
    tpu.vector_store %arg8[%c0_31, %c0_32], %60 {strides = array<i32>} : memref<8x256xf32, #tpu.memory_space<vmem>>, vector<8x256xf32>,
    return
  }
}

</mosaic_0001>

<llo_original>
// kernel: tpu_custom_call.1
$region0: #{tpu_custom_call.1}
  #allocation0 [shape = 'u32[]', space=smem, size = 0x4, offset = 0x4, fixed_abs, tag = 'smem constant byte address 0x4 - core index']
  #allocation1 [shape = 'u32[144,128]{1,0:T(1,128)}', space=vmem, size = 0x12000, scoped, tag = 'internal scratch']
  %s0 = inlined_call_operand.hbm [shape: f32[3], index: 0, kind: input, shape index: {}]
  %s1 = inlined_call_operand.hbm [shape: f32[8,1024], index: 1, kind: input, shape index: {}]
  %s2 = inlined_call_operand.hbm [shape: f32[3072,128], index: 2, kind: input, shape index: {}]
  %s3 = inlined_call_operand.hbm [shape: f32[3,1,128], index: 3, kind: input, shape index: {}]
  %s4 = inlined_call_operand.hbm [shape: f32[384,128], index: 4, kind: input, shape index: {}]
  %s5 = inlined_call_operand.hbm [shape: f32[3,1,128], index: 5, kind: input, shape index: {}]
  %s6 = inlined_call_operand.hbm [shape: f32[128,256], index: 6, kind: input, shape index: {}]
  %s7 = inlined_call_operand.hbm [shape: f32[1,256], index: 7, kind: input, shape index: {}]
  %s8 = inlined_call_operand.hbm [shape: f32[8,256], index: 8, kind: output, shape index: {}]
  %s9 = sld [smem:[#allocation0]]
  $region74: #{tpu_custom_call.1} parent=0
    _
  %s11 = ssub.s32 1, %s9
  %s12 = scalar_select 0, %s11, %s9
  $region1: #{tpu_custom_call.1} parent=0
    #allocation2 [shape = 'u8[512]{0}', space=smem, size = 0x200, scoped, tag = 'input window, operand 0, single buffered']
    #allocation3 [shape = 's32[1]{0}', space=sflag, size = 0x4, scoped, tag = 'scoped memory for tpu_custom_call.1']
    #allocation4 [shape = 's32[1]{0}', space=sflag, size = 0x4, scoped, tag = 'scoped memory for tpu_custom_call.1']
    #allocation5 [shape = 's32[1]{0}', space=sflag, size = 0x4, scoped, tag = 'scoped memory for tpu_custom_call.1']
    #allocation6 [shape = 'u8[32768]{0}', space=vmem, size = 0x8000, scoped, tag = 'input window, operand 1, single buffered']
    #allocation7 [shape = 'u8[1572864]{0}', space=vmem, size = 0x180000, scoped, tag = 'input window, operand 2, single buffered']
    #allocation8 [shape = 's32[1]{0}', space=sflag, size = 0x4, scoped, tag = 'scoped memory for tpu_custom_call.1']
    #allocation9 [shape = 'u8[1536]{0}', space=vmem, size = 0x800, scoped, tag = 'input window, operand 3, single buffered']
    #allocation10 [shape = 'u8[196608]{0}', space=vmem, size = 0x30000, scoped, tag = 'input window, operand 4, single buffered']
    #allocation11 [shape = 's32[1]{0}', space=sflag, size = 0x4, scoped, tag = 'scoped memory for tpu_custom_call.1']
    #allocation12 [shape = 'u8[1536]{0}', space=vmem, size = 0x800, scoped, tag = 'input window, operand 5, single buffered']
    #allocation13 [shape = 'u8[131072]{0}', space=vmem, size = 0x20000, scoped, tag = 'input window, operand 6, single buffered']
    #allocation14 [shape = 's32[1]{0}', space=sflag, size = 0x4, scoped, tag = 'scoped memory for tpu_custom_call.1']
    #allocation15 [shape = 'u8[1024]{0}', space=vmem, size = 0x400, scoped, tag = 'input window, operand 7, single buffered']
    #allocation16 [shape = 'u8[8192]{0}', space=vmem, size = 0x2000, scoped, tag = 'output window, operand 0, single buffered']
    %13 = vsyncpa [#allocation5], 0
    %14 = vsyncpa [#allocation3], 0
    %15 = vsyncpa [#allocation8], 0
    %16 = vsyncpa [#allocation11], 0
    %17 = vsyncpa [#allocation14], 0
    %18 = vsyncpa [#allocation4], 0
    // Predicated region
    $region2: #{tpu_custom_call.1} parent=1 // pred_check
      _
    $region3: #{tpu_custom_call.1} parent=1 // pred_check_branch
      %20 = sbr.rel (0) target = $region5
    $region4: #{tpu_custom_call.1} parent=1 // pred_region
      %s22 = ssub.s32 16, 16
      %23 = vsyncadd [#allocation5], %s22
      %26 = dma.hbm_to_smem %s0, 16, [#allocation2], [#allocation5]
    $region5: #{tpu_custom_call.1} parent=1 // pred_fallthru
      _
    // Predicated region
    $region6: #{tpu_custom_call.1} parent=1 // pred_check
      _
    $region7: #{tpu_custom_call.1} parent=1 // pred_check_branch
      %28 = sbr.rel (0) target = $region9
    $region8: #{tpu_custom_call.1} parent=1 // pred_region
      %s30 = ssub.s32 1024, 1024
      %31 = vsyncadd [#allocation3], %s30
      %s33 = sshll.u32 [#allocation6], 4
      %s34 = int_to_ptr.vmem [resolvable:$true] %s33
      %36 = dma.hbm_to_vmem [thread:$0]  %s1, 1024, %s34, [#allocation3]
    $region9: #{tpu_custom_call.1} parent=1 // pred_fallthru
      _
    // Predicated region
    $region10: #{tpu_custom_call.1} parent=1 // pred_check
      _
    $region11: #{tpu_custom_call.1} parent=1 // pred_check_branch
      %38 = sbr.rel (0) target = $region13
    $region12: #{tpu_custom_call.1} parent=1 // pred_region
      %s40 = ssub.s32 49152, 49152
      %41 = vsyncadd [#allocation8], %s40
      %s42 = sshll.u32 [#allocation7], 4
      %s43 = int_to_ptr.vmem [resolvable:$true] %s42
      %48 = dma.hbm_to_vmem [thread:$0]  %s2, 49152, %s43, [#allocation8], 128, 128, 8
    $region13: #{tpu_custom_call.1} parent=1 // pred_fallthru
      _
    // Predicated region
    $region14: #{tpu_custom_call.1} parent=1 // pred_check
      _
    $region15: #{tpu_custom_call.1} parent=1 // pred_check_branch
      %50 = sbr.rel (0) target = $region17
    $region16: #{tpu_custom_call.1} parent=1 // pred_region
      %s52 = ssub.s32 48, 48
      %53 = vsyncadd [#allocation8], %s52
      %s54 = sshll.u32 [#allocation9], 4
      %s55 = int_to_ptr.vmem [resolvable:$true] %s54
      %60 = dma.hbm_to_vmem [thread:$0]  %s3, 48, %s55, [#allocation8], 16, 16, 1
    $region17: #{tpu_custom_call.1} parent=1 // pred_fallthru
      _
    // Predicated region
    $region18: #{tpu_custom_call.1} parent=1 // pred_check
      _
    $region19: #{tpu_custom_call.1} parent=1 // pred_check_branch
      %62 = sbr.rel (0) target = $region21
    $region20: #{tpu_custom_call.1} parent=1 // pred_region
      %s64 = ssub.s32 6144, 6144
      %65 = vsyncadd [#allocation11], %s64
      %s66 = sshll.u32 [#allocation10], 4
      %s67 = int_to_ptr.vmem [resolvable:$true] %s66
      %72 = dma.hbm_to_vmem [thread:$0]  %s4, 6144, %s67, [#allocation11], 128, 128, 8
    $region21: #{tpu_custom_call.1} parent=1 // pred_fallthru
      _
    // Predicated region
    $region22: #{tpu_custom_call.1} parent=1 // pred_check
      _
    $region23: #{tpu_custom_call.1} parent=1 // pred_check_branch
      %74 = sbr.rel (0) target = $region25
    $region24: #{tpu_custom_call.1} parent=1 // pred_region
      %s76 = ssub.s32 48, 48
      %77 = vsyncadd [#allocation11], %s76
      %s78 = sshll.u32 [#allocation12], 4
      %s79 = int_to_ptr.vmem [resolvable:$true] %s78
      %84 = dma.hbm_to_vmem [thread:$0]  %s5, 48, %s79, [#allocation11], 16, 16, 1
    $region25: #{tpu_custom_call.1} parent=1 // pred_fallthru
      _
    // Predicated region
    $region26: #{tpu_custom_call.1} parent=1 // pred_check
      _
    $region27: #{tpu_custom_call.1} parent=1 // pred_check_branch
      %86 = sbr.rel (0) target = $region29
    $region28: #{tpu_custom_call.1} parent=1 // pred_region
      %s88 = ssub.s32 4096, 4096
      %89 = vsyncadd [#allocation14], %s88
      %s90 = sshll.u32 [#allocation13], 4
      %s91 = int_to_ptr.vmem [resolvable:$true] %s90
      %96 = dma.hbm_to_vmem [thread:$0]  %s6, 4096, %s91, [#allocation14], 256, 256, 16
    $region29: #{tpu_custom_call.1} parent=1 // pred_fallthru
      _
    // Predicated region
    $region30: #{tpu_custom_call.1} parent=1 // pred_check
      _
    $region31: #{tpu_custom_call.1} parent=1 // pred_check_branch
      %98 = sbr.rel (0) target = $region33
    $region32: #{tpu_custom_call.1} parent=1 // pred_region
      %s100 = ssub.s32 32, 32
      %101 = vsyncadd [#allocation14], %s100
      %s103 = sshll.u32 [#allocation15], 4
      %s104 = int_to_ptr.vmem [resolvable:$true] %s103
      %106 = dma.hbm_to_vmem [thread:$0]  %s7, 32, %s104, [#allocation14]
    $region33: #{tpu_custom_call.1} parent=1 // pred_fallthru
      _
    // Predicated region
    $region34: #{tpu_custom_call.1} parent=1 // pred_check
      _
    $region35: #{tpu_custom_call.1} parent=1 // pred_check_branch
      %108 = sbr.rel (0) target = $region37
    $region36: #{tpu_custom_call.1} parent=1 // pred_region
      %109 = dma.done [#allocation5], 16
    $region37: #{tpu_custom_call.1} parent=1 // pred_fallthru
      _
    // Predicated region
    $region38: #{tpu_custom_call.1} parent=1 // pred_check
      _
    $region39: #{tpu_custom_call.1} parent=1 // pred_check_branch
      %111 = sbr.rel (0) target = $region41
    $region40: #{tpu_custom_call.1} parent=1 // pred_region
      %112 = dma.done [#allocation3], 1024
    $region41: #{tpu_custom_call.1} parent=1 // pred_fallthru
      _
    // Predicated region
    $region42: #{tpu_custom_call.1} parent=1 // pred_check
      _
    $region43: #{tpu_custom_call.1} parent=1 // pred_check_branch
      %114 = sbr.rel (0) target = $region45
    $region44: #{tpu_custom_call.1} parent=1 // pred_region
      %115 = dma.done [#allocation8], 49152
    $region45: #{tpu_custom_call.1} parent=1 // pred_fallthru
      _
    // Predicated region
    $region46: #{tpu_custom_call.1} parent=1 // pred_check
      _
    $region47: #{tpu_custom_call.1} parent=1 // pred_check_branch
      %117 = sbr.rel (0) target = $region49
    $region48: #{tpu_custom_call.1} parent=1 // pred_region
      %118 = dma.done [#allocation8], 48
    $region49: #{tpu_custom_call.1} parent=1 // pred_fallthru
      _
    // Predicated region
    $region50: #{tpu_custom_call.1} parent=1 // pred_check
      _
    $region51: #{tpu_custom_call.1} parent=1 // pred_check_branch
      %120 = sbr.rel (0) target = $region53
    $region52: #{tpu_custom_call.1} parent=1 // pred_region
      %121 = dma.done [#allocation11], 6144
    $region53: #{tpu_custom_call.1} parent=1 // pred_fallthru
      _
    // Predicated region
    $region54: #{tpu_custom_call.1} parent=1 // pred_check
      _
    $region55: #{tpu_custom_call.1} parent=1 // pred_check_branch
      %123 = sbr.rel (0) target = $region57
    $region56: #{tpu_custom_call.1} parent=1 // pred_region
      %124 = dma.done [#allocation11], 48
    $region57: #{tpu_custom_call.1} parent=1 // pred_fallthru
      _
    // Predicated region
    $region58: #{tpu_custom_call.1} parent=1 // pred_check
      _
    $region59: #{tpu_custom_call.1} parent=1 // pred_check_branch
      %126 = sbr.rel (0) target = $region61
    $region60: #{tpu_custom_call.1} parent=1 // pred_region
      %127 = dma.done [#allocation14], 4096
    $region61: #{tpu_custom_call.1} parent=1 // pred_fallthru
      _
    // Predicated region
    $region62: #{tpu_custom_call.1} parent=1 // pred_check
      _
    $region63: #{tpu_custom_call.1} parent=1 // pred_check_branch
      %129 = sbr.rel (0) target = $region65
    $region64: #{tpu_custom_call.1} parent=1 // pred_region
      %130 = dma.done [#allocation14], 32
    $region65: #{tpu_custom_call.1} parent=1 // pred_fallthru
      _
    %131 = sfence
    %s132 = sld [smem:[#allocation2]]
    %s133 = sld [smem:[#allocation2 + $0x1]]
    %s134 = sld [smem:[#allocation2 + $0x2]]
    %v135 = vld [vmem:[#allocation6] sm:$0xff]
    %v136 = vld [vmem:[#allocation6 + $0x8] sm:$0xff]
    %v137 = vld [vmem:[#allocation6 + $0x10] sm:$0xff]
    %v138 = vld [vmem:[#allocation6 + $0x18] sm:$0xff]
    %v139 = vld [vmem:[#allocation6 + $0x20] sm:$0xff]
    %v140 = vld [vmem:[#allocation6 + $0x28] sm:$0xff]
    %v141 = vld [vmem:[#allocation6 + $0x30] sm:$0xff]
    %v142 = vld [vmem:[#allocation6 + $0x38] sm:$0xff]
    %v143 = vstv %s132
    %v144 = vmul.f32 %v143, %v135
    %v145 = vmul.f32 %v143, %v136
    %v146 = vmul.f32 %v143, %v137
    %v147 = vmul.f32 %v143, %v138
    %v148 = vmul.f32 %v143, %v139
    %v149 = vmul.f32 %v143, %v140
    %v150 = vmul.f32 %v143, %v141
    %v151 = vmul.f32 %v143, %v142
    %v152 = vstv %s133
    %v153 = vmul.f32 %v152, %v135
    %v154 = vmul.f32 %v152, %v136
    %v155 = vmul.f32 %v152, %v137
    %v156 = vmul.f32 %v152, %v138
    %v157 = vmul.f32 %v152, %v139
    %v158 = vmul.f32 %v152, %v140
    %v159 = vmul.f32 %v152, %v141
    %v160 = vmul.f32 %v152, %v142
    %v161 = vstv %s134
    %v162 = vmul.f32 %v161, %v135
    %v163 = vmul.f32 %v161, %v136
    %v164 = vmul.f32 %v161, %v137
    %v165 = vmul.f32 %v161, %v138
    %v166 = vmul.f32 %v161, %v139
    %v167 = vmul.f32 %v161, %v140
    %v168 = vmul.f32 %v161, %v141
    %v169 = vmul.f32 %v161, %v142
    %v170 = vld [vmem:[#allocation7] sm:$0xff]
    %v171 = vld [vmem:[#allocation7 + $0x8] sm:$0xff]
    %v172 = vld [vmem:[#allocation7 + $0x10] sm:$0xff]
    %v173 = vld [vmem:[#allocation7 + $0x18] sm:$0xff]
    %v174 = vld [vmem:[#allocation7 + $0x20] sm:$0xff]
    %v175 = vld [vmem:[#allocation7 + $0x28] sm:$0xff]
    %v176 = vld [vmem:[#allocation7 + $0x30] sm:$0xff]
    %v177 = vld [vmem:[#allocation7 + $0x38] sm:$0xff]
    %v178 = vld [vmem:[#allocation7 + $0x40] sm:$0xff]
    %v179 = vld [vmem:[#allocation7 + $0x48] sm:$0xff]
    %v180 = vld [vmem:[#allocation7 + $0x50] sm:$0xff]
    %v181 = vld [vmem:[#allocation7 + $0x58] sm:$0xff]
    %v182 = vld [vmem:[#allocation7 + $0x60] sm:$0xff]
    %v183 = vld [vmem:[#allocation7 + $0x68] sm:$0xff]
    %v184 = vld [vmem:[#allocation7 + $0x70] sm:$0xff]
    %v185 = vld [vmem:[#allocation7 + $0x78] sm:$0xff]
    %v186 = vld [vmem:[#allocation7 + $0x80] sm:$0xff]
    %v187 = vld [vmem:[#allocation7 + $0x88] sm:$0xff]
    %v188 = vld [vmem:[#allocation7 + $0x90] sm:$0xff]
    %v189 = vld [vmem:[#allocation7 + $0x98] sm:$0xff]
    %v190 = vld [vmem:[#allocation7 + $0xa0] sm:$0xff]
    %v191 = vld [vmem:[#allocation7 + $0xa8] sm:$0xff]
    %v192 = vld [vmem:[#allocation7 + $0xb0] sm:$0xff]
    %v193 = vld [vmem:[#allocation7 + $0xb8] sm:$0xff]
    %v194 = vld [vmem:[#allocation7 + $0xc0] sm:$0xff]
    %v195 = vld [vmem:[#allocation7 + $0xc8] sm:$0xff]
    %v196 = vld [vmem:[#allocation7 + $0xd0] sm:$0xff]
    %v197 = vld [vmem:[#allocation7 + $0xd8] sm:$0xff]
    %v198 = vld [vmem:[#allocation7 + $0xe0] sm:$0xff]
    %v199 = vld [vmem:[#allocation7 + $0xe8] sm:$0xff]
    %v200 = vld [vmem:[#allocation7 + $0xf0] sm:$0xff]
    %v201 = vld [vmem:[#allocation7 + $0xf8] sm:$0xff]
    %v202 = vld [vmem:[#allocation7 + $0x100] sm:$0xff]
    %v203 = vld [vmem:[#allocation7 + $0x108] sm:$0xff]
    %v204 = vld [vmem:[#allocation7 + $0x110] sm:$0xff]
    %v205 = vld [vmem:[#allocation7 + $0x118] sm:$0xff]
    %v206 = vld [vmem:[#allocation7 + $0x120] sm:$0xff]
    %v207 = vld [vmem:[#allocation7 + $0x128] sm:$0xff]
    %v208 = vld [vmem:[#allocation7 + $0x130] sm:$0xff]
    %v209 = vld [vmem:[#allocation7 + $0x138] sm:$0xff]
    %v210 = vld [vmem:[#allocation7 + $0x140] sm:$0xff]
    %v211 = vld [vmem:[#allocation7 + $0x148] sm:$0xff]
    %v212 = vld [vmem:[#allocation7 + $0x150] sm:$0xff]
    %v213 = vld [vmem:[#allocation7 + $0x158] sm:$0xff]
    %v214 = vld [vmem:[#allocation7 + $0x160] sm:$0xff]
    %v215 = vld [vmem:[#allocation7 + $0x168] sm:$0xff]
    %v216 = vld [vmem:[#allocation7 + $0x170] sm:$0xff]
    %v217 = vld [vmem:[#allocation7 + $0x178] sm:$0xff]
    %v218 = vld [vmem:[#allocation7 + $0x180] sm:$0xff]
    %v219 = vld [vmem:[#allocation7 + $0x188] sm:$0xff]
    %v220 = vld [vmem:[#allocation7 + $0x190] sm:$0xff]
    %v221 = vld [vmem:[#allocation7 + $0x198] sm:$0xff]
    %v222 = vld [vmem:[#allocation7 + $0x1a0] sm:$0xff]
    %v223 = vld [vmem:[#allocation7 + $0x1a8] sm:$0xff]
    %v224 = vld [vmem:[#allocation7 + $0x1b0] sm:$0xff]
    %v225 = vld [vmem:[#allocation7 + $0x1b8] sm:$0xff]
    %v226 = vld [vmem:[#allocation7 + $0x1c0] sm:$0xff]
    %v227 = vld [vmem:[#allocation7 + $0x1c8] sm:$0xff]
    %v228 = vld [vmem:[#allocation7 + $0x1d0] sm:$0xff]
    %v229 = vld [vmem:[#allocation7 + $0x1d8] sm:$0xff]
    %v230 = vld [vmem:[#allocation7 + $0x1e0] sm:$0xff]
    %v231 = vld [vmem:[#allocation7 + $0x1e8] sm:$0xff]
    %v232 = vld [vmem:[#allocation7 + $0x1f0] sm:$0xff]
    %v233 = vld [vmem:[#allocation7 + $0x1f8] sm:$0xff]
    %v234 = vld [vmem:[#allocation7 + $0x200] sm:$0xff]
    %v235 = vld [vmem:[#allocation7 + $0x208] sm:$0xff]
    %v236 = vld [vmem:[#allocation7 + $0x210] sm:$0xff]
    %v237 = vld [vmem:[#allocation7 + $0x218] sm:$0xff]
    %v238 = vld [vmem:[#allocation7 + $0x220] sm:$0xff]
    %v239 = vld [vmem:[#allocation7 + $0x228] sm:$0xff]
    %v240 = vld [vmem:[#allocation7 + $0x230] sm:$0xff]
    %v241 = vld [vmem:[#allocation7 + $0x238] sm:$0xff]
    %v242 = vld [vmem:[#allocation7 + $0x240] sm:$0xff]
    %v243 = vld [vmem:[#allocation7 + $0x248] sm:$0xff]
    %v244 = vld [vmem:[#allocation7 + $0x250] sm:$0xff]
    %v245 = vld [vmem:[#allocation7 + $0x258] sm:$0xff]
    %v246 = vld [vmem:[#allocation7 + $0x260] sm:$0xff]
    %v247 = vld [vmem:[#allocation7 + $0x268] sm:$0xff]
    %v248 = vld [vmem:[#allocation7 + $0x270] sm:$0xff]
    %v249 = vld [vmem:[#allocation7 + $0x278] sm:$0xff]
    %v250 = vld [vmem:[#allocation7 + $0x280] sm:$0xff]
    %v251 = vld [vmem:[#allocation7 + $0x288] sm:$0xff]
    %v252 = vld [vmem:[#allocation7 + $0x290] sm:$0xff]
    %v253 = vld [vmem:[#allocation7 + $0x298] sm:$0xff]
    %v254 = vld [vmem:[#allocation7 + $0x2a0] sm:$0xff]
    %v255 = vld [vmem:[#allocation7 + $0x2a8] sm:$0xff]
    %v256 = vld [vmem:[#allocation7 + $0x2b0] sm:$0xff]
    %v257 = vld [vmem:[#allocation7 + $0x2b8] sm:$0xff]
    %v258 = vld [vmem:[#allocation7 + $0x2c0] sm:$0xff]
    %v259 = vld [vmem:[#allocation7 + $0x2c8] sm:$0xff]
    %v260 = vld [vmem:[#allocation7 + $0x2d0] sm:$0xff]
    %v261 = vld [vmem:[#allocation7 + $0x2d8] sm:$0xff]
    %v262 = vld [vmem:[#allocation7 + $0x2e0] sm:$0xff]
    %v263 = vld [vmem:[#allocation7 + $0x2e8] sm:$0xff]
    %v264 = vld [vmem:[#allocation7 + $0x2f0] sm:$0xff]
    %v265 = vld [vmem:[#allocation7 + $0x2f8] sm:$0xff]
    %v266 = vld [vmem:[#allocation7 + $0x300] sm:$0xff]
    %v267 = vld [vmem:[#allocation7 + $0x308] sm:$0xff]
    %v268 = vld [vmem:[#allocation7 + $0x310] sm:$0xff]
    %v269 = vld [vmem:[#allocation7 + $0x318] sm:$0xff]
    %v270 = vld [vmem:[#allocation7 + $0x320] sm:$0xff]
    %v271 = vld [vmem:[#allocation7 + $0x328] sm:$0xff]
    %v272 = vld [vmem:[#allocation7 + $0x330] sm:$0xff]
    %v273 = vld [vmem:[#allocation7 + $0x338] sm:$0xff]
    %v274 = vld [vmem:[#allocation7 + $0x340] sm:$0xff]
    %v275 = vld [vmem:[#allocation7 + $0x348] sm:$0xff]
    %v276 = vld [vmem:[#allocation7 + $0x350] sm:$0xff]
    %v277 = vld [vmem:[#allocation7 + $0x358] sm:$0xff]
    %v278 = vld [vmem:[#allocation7 + $0x360] sm:$0xff]
    %v279 = vld [vmem:[#allocation7 + $0x368] sm:$0xff]
    %v280 = vld [vmem:[#allocation7 + $0x370] sm:$0xff]
    %v281 = vld [vmem:[#allocation7 + $0x378] sm:$0xff]
    %v282 = vld [vmem:[#allocation7 + $0x380] sm:$0xff]
    %v283 = vld [vmem:[#allocation7 + $0x388] sm:$0xff]
    %v284 = vld [vmem:[#allocation7 + $0x390] sm:$0xff]
    %v285 = vld [vmem:[#allocation7 + $0x398] sm:$0xff]
    %v286 = vld [vmem:[#allocation7 + $0x3a0] sm:$0xff]
    %v287 = vld [vmem:[#allocation7 + $0x3a8] sm:$0xff]
    %v288 = vld [vmem:[#allocation7 + $0x3b0] sm:$0xff]
    %v289 = vld [vmem:[#allocation7 + $0x3b8] sm:$0xff]
    %v290 = vld [vmem:[#allocation7 + $0x3c0] sm:$0xff]
    %v291 = vld [vmem:[#allocation7 + $0x3c8] sm:$0xff]
    %v292 = vld [vmem:[#allocation7 + $0x3d0] sm:$0xff]
    %v293 = vld [vmem:[#allocation7 + $0x3d8] sm:$0xff]
    %v294 = vld [vmem:[#allocation7 + $0x3e0] sm:$0xff]
    %v295 = vld [vmem:[#allocation7 + $0x3e8] sm:$0xff]
    %v296 = vld [vmem:[#allocation7 + $0x3f0] sm:$0xff]
    %v297 = vld [vmem:[#allocation7 + $0x3f8] sm:$0xff]
    %v298 = vld [vmem:[#allocation7 + $0x400] sm:$0xff]
    %v299 = vld [vmem:[#allocation7 + $0x408] sm:$0xff]
    %v300 = vld [vmem:[#allocation7 + $0x410] sm:$0xff]
    %v301 = vld [vmem:[#allocation7 + $0x418] sm:$0xff]
    %v302 = vld [vmem:[#allocation7 + $0x420] sm:$0xff]
    %v303 = vld [vmem:[#allocation7 + $0x428] sm:$0xff]
    %v304 = vld [vmem:[#allocation7 + $0x430] sm:$0xff]
    %v305 = vld [vmem:[#allocation7 + $0x438] sm:$0xff]
    %v306 = vld [vmem:[#allocation7 + $0x440] sm:$0xff]
    %v307 = vld [vmem:[#allocation7 + $0x448] sm:$0xff]
    %v308 = vld [vmem:[#allocation7 + $0x450] sm:$0xff]
    %v309 = vld [vmem:[#allocation7 + $0x458] sm:$0xff]
    %v310 = vld [vmem:[#allocation7 + $0x460] sm:$0xff]
    %v311 = vld [vmem:[#allocation7 + $0x468] sm:$0xff]
    %v312 = vld [vmem:[#allocation7 + $0x470] sm:$0xff]
    %v313 = vld [vmem:[#allocation7 + $0x478] sm:$0xff]
    %v314 = vld [vmem:[#allocation7 + $0x480] sm:$0xff]
    %v315 = vld [vmem:[#allocation7 + $0x488] sm:$0xff]
    %v316 = vld [vmem:[#allocation7 + $0x490] sm:$0xff]
    %v317 = vld [vmem:[#allocation7 + $0x498] sm:$0xff]
    %v318 = vld [vmem:[#allocation7 + $0x4a0] sm:$0xff]
    %v319 = vld [vmem:[#allocation7 + $0x4a8] sm:$0xff]
    %v320 = vld [vmem:[#allocation7 + $0x4b0] sm:$0xff]
    %v321 = vld [vmem:[#allocation7 + $0x4b8] sm:$0xff]
    %v322 = vld [vmem:[#allocation7 + $0x4c0] sm:$0xff]
    %v323 = vld [vmem:[#allocation7 + $0x4c8] sm:$0xff]
    %v324 = vld [vmem:[#allocation7 + $0x4d0] sm:$0xff]
    %v325 = vld [vmem:[#allocation7 + $0x4d8] sm:$0xff]
    %v326 = vld [vmem:[#allocation7 + $0x4e0] sm:$0xff]
    %v327 = vld [vmem:[#allocation7 + $0x4e8] sm:$0xff]
    %v328 = vld [vmem:[#allocation7 + $0x4f0] sm:$0xff]
    %v329 = vld [vmem:[#allocation7 + $0x4f8] sm:$0xff]
    %v330 = vld [vmem:[#allocation7 + $0x500] sm:$0xff]
    %v331 = vld [vmem:[#allocation7 + $0x508] sm:$0xff]
    %v332 = vld [vmem:[#allocation7 + $0x510] sm:$0xff]
    %v333 = vld [vmem:[#allocation7 + $0x518] sm:$0xff]
    %v334 = vld [vmem:[#allocation7 + $0x520] sm:$0xff]
    %v335 = vld [vmem:[#allocation7 + $0x528] sm:$0xff]
    %v336 = vld [vmem:[#allocation7 + $0x530] sm:$0xff]
    %v337 = vld [vmem:[#allocation7 + $0x538] sm:$0xff]
    %v338 = vld [vmem:[#allocation7 + $0x540] sm:$0xff]
    %v339 = vld [vmem:[#allocation7 + $0x548] sm:$0xff]
    %v340 = vld [vmem:[#allocation7 + $0x550] sm:$0xff]
    %v341 = vld [vmem:[#allocation7 + $0x558] sm:$0xff]
    %v342 = vld [vmem:[#allocation7 + $0x560] sm:$0xff]
    %v343 = vld [vmem:[#allocation7 + $0x568] sm:$0xff]
    %v344 = vld [vmem:[#allocation7 + $0x570] sm:$0xff]
    %v345 = vld [vmem:[#allocation7 + $0x578] sm:$0xff]
    %v346 = vld [vmem:[#allocation7 + $0x580] sm:$0xff]
    %v347 = vld [vmem:[#allocation7 + $0x588] sm:$0xff]
    %v348 = vld [vmem:[#allocation7 + $0x590] sm:$0xff]
    %v349 = vld [vmem:[#allocation7 + $0x598] sm:$0xff]
    %v350 = vld [vmem:[#allocation7 + $0x5a0] sm:$0xff]
    %v351 = vld [vmem:[#allocation7 + $0x5a8] sm:$0xff]
    %v352 = vld [vmem:[#allocation7 + $0x5b0] sm:$0xff]
    %v353 = vld [vmem:[#allocation7 + $0x5b8] sm:$0xff]
    %v354 = vld [vmem:[#allocation7 + $0x5c0] sm:$0xff]
    %v355 = vld [vmem:[#allocation7 + $0x5c8] sm:$0xff]
    %v356 = vld [vmem:[#allocation7 + $0x5d0] sm:$0xff]
    %v357 = vld [vmem:[#allocation7 + $0x5d8] sm:$0xff]
    %v358 = vld [vmem:[#allocation7 + $0x5e0] sm:$0xff]
    %v359 = vld [vmem:[#allocation7 + $0x5e8] sm:$0xff]
    %v360 = vld [vmem:[#allocation7 + $0x5f0] sm:$0xff]
    %v361 = vld [vmem:[#allocation7 + $0x5f8] sm:$0xff]
    %v362 = vld [vmem:[#allocation7 + $0x600] sm:$0xff]
    %v363 = vld [vmem:[#allocation7 + $0x608] sm:$0xff]
    %v364 = vld [vmem:[#allocation7 + $0x610] sm:$0xff]
    %v365 = vld [vmem:[#allocation7 + $0x618] sm:$0xff]
    %v366 = vld [vmem:[#allocation7 + $0x620] sm:$0xff]
    %v367 = vld [vmem:[#allocation7 + $0x628] sm:$0xff]
    %v368 = vld [vmem:[#allocation7 + $0x630] sm:$0xff]
    %v369 = vld [vmem:[#allocation7 + $0x638] sm:$0xff]
    %v370 = vld [vmem:[#allocation7 + $0x640] sm:$0xff]
    %v371 = vld [vmem:[#allocation7 + $0x648] sm:$0xff]
    %v372 = vld [vmem:[#allocation7 + $0x650] sm:$0xff]
    %v373 = vld [vmem:[#allocation7 + $0x658] sm:$0xff]
    %v374 = vld [vmem:[#allocation7 + $0x660] sm:$0xff]
    %v375 = vld [vmem:[#allocation7 + $0x668] sm:$0xff]
    %v376 = vld [vmem:[#allocation7 + $0x670] sm:$0xff]
    %v377 = vld [vmem:[#allocation7 + $0x678] sm:$0xff]
    %v378 = vld [vmem:[#allocation7 + $0x680] sm:$0xff]
    %v379 = vld [vmem:[#allocation7 + $0x688] sm:$0xff]
    %v380 = vld [vmem:[#allocation7 + $0x690] sm:$0xff]
    %v381 = vld [vmem:[#allocation7 + $0x698] sm:$0xff]
    %v382 = vld [vmem:[#allocation7 + $0x6a0] sm:$0xff]
    %v383 = vld [vmem:[#allocation7 + $0x6a8] sm:$0xff]
    %v384 = vld [vmem:[#allocation7 + $0x6b0] sm:$0xff]
    %v385 = vld [vmem:[#allocation7 + $0x6b8] sm:$0xff]
    %v386 = vld [vmem:[#allocation7 + $0x6c0] sm:$0xff]
    %v387 = vld [vmem:[#allocation7 + $0x6c8] sm:$0xff]
    %v388 = vld [vmem:[#allocation7 + $0x6d0] sm:$0xff]
    %v389 = vld [vmem:[#allocation7 + $0x6d8] sm:$0xff]
    %v390 = vld [vmem:[#allocation7 + $0x6e0] sm:$0xff]
    %v391 = vld [vmem:[#allocation7 + $0x6e8] sm:$0xff]
    %v392 = vld [vmem:[#allocation7 + $0x6f0] sm:$0xff]
    %v393 = vld [vmem:[#allocation7 + $0x6f8] sm:$0xff]
    %v394 = vld [vmem:[#allocation7 + $0x700] sm:$0xff]
    %v395 = vld [vmem:[#allocation7 + $0x708] sm:$0xff]
    %v396 = vld [vmem:[#allocation7 + $0x710] sm:$0xff]
    %v397 = vld [vmem:[#allocation7 + $0x718] sm:$0xff]
    %v398 = vld [vmem:[#allocation7 + $0x720] sm:$0xff]
    %v399 = vld [vmem:[#allocation7 + $0x728] sm:$0xff]
    %v400 = vld [vmem:[#allocation7 + $0x730] sm:$0xff]
    %v401 = vld [vmem:[#allocation7 + $0x738] sm:$0xff]
    %v402 = vld [vmem:[#allocation7 + $0x740] sm:$0xff]
    %v403 = vld [vmem:[#allocation7 + $0x748] sm:$0xff]
    %v404 = vld [vmem:[#allocation7 + $0x750] sm:$0xff]
    %v405 = vld [vmem:[#allocation7 + $0x758] sm:$0xff]
    %v406 = vld [vmem:[#allocation7 + $0x760] sm:$0xff]
    %v407 = vld [vmem:[#allocation7 + $0x768] sm:$0xff]
    %v408 = vld [vmem:[#allocation7 + $0x770] sm:$0xff]
    %v409 = vld [vmem:[#allocation7 + $0x778] sm:$0xff]
    %v410 = vld [vmem:[#allocation7 + $0x780] sm:$0xff]
    %v411 = vld [vmem:[#allocation7 + $0x788] sm:$0xff]
    %v412 = vld [vmem:[#allocation7 + $0x790] sm:$0xff]
    %v413 = vld [vmem:[#allocation7 + $0x798] sm:$0xff]
    %v414 = vld [vmem:[#allocation7 + $0x7a0] sm:$0xff]
    %v415 = vld [vmem:[#allocation7 + $0x7a8] sm:$0xff]
    %v416 = vld [vmem:[#allocation7 + $0x7b0] sm:$0xff]
    %v417 = vld [vmem:[#allocation7 + $0x7b8] sm:$0xff]
    %v418 = vld [vmem:[#allocation7 + $0x7c0] sm:$0xff]
    %v419 = vld [vmem:[#allocation7 + $0x7c8] sm:$0xff]
    %v420 = vld [vmem:[#allocation7 + $0x7d0] sm:$0xff]
    %v421 = vld [vmem:[#allocation7 + $0x7d8] sm:$0xff]
    %v422 = vld [vmem:[#allocation7 + $0x7e0] sm:$0xff]
    %v423 = vld [vmem:[#allocation7 + $0x7e8] sm:$0xff]
    %v424 = vld [vmem:[#allocation7 + $0x7f0] sm:$0xff]
    %v425 = vld [vmem:[#allocation7 + $0x7f8] sm:$0xff]
    %v426 = vld [vmem:[#allocation7 + $0x800] sm:$0xff]
    %v427 = vld [vmem:[#allocation7 + $0x808] sm:$0xff]
    %v428 = vld [vmem:[#allocation7 + $0x810] sm:$0xff]
    %v429 = vld [vmem:[#allocation7 + $0x818] sm:$0xff]
    %v430 = vld [vmem:[#allocation7 + $0x820] sm:$0xff]
    %v431 = vld [vmem:[#allocation7 + $0x828] sm:$0xff]
    %v432 = vld [vmem:[#allocation7 + $0x830] sm:$0xff]
    %v433 = vld [vmem:[#allocation7 + $0x838] sm:$0xff]
    %v434 = vld [vmem:[#allocation7 + $0x840] sm:$0xff]
    %v435 = vld [vmem:[#allocation7 + $0x848] sm:$0xff]
    %v436 = vld [vmem:[#allocation7 + $0x850] sm:$0xff]
    %v437 = vld [vmem:[#allocation7 + $0x858] sm:$0xff]
    %v438 = vld [vmem:[#allocation7 + $0x860] sm:$0xff]
    %v439 = vld [vmem:[#allocation7 + $0x868] sm:$0xff]
    %v440 = vld [vmem:[#allocation7 + $0x870] sm:$0xff]
    %v441 = vld [vmem:[#allocation7 + $0x878] sm:$0xff]
    %v442 = vld [vmem:[#allocation7 + $0x880] sm:$0xff]
    %v443 = vld [vmem:[#allocation7 + $0x888] sm:$0xff]
    %v444 = vld [vmem:[#allocation7 + $0x890] sm:$0xff]
    %v445 = vld [vmem:[#allocation7 + $0x898] sm:$0xff]
    %v446 = vld [vmem:[#allocation7 + $0x8a0] sm:$0xff]
    %v447 = vld [vmem:[#allocation7 + $0x8a8] sm:$0xff]
    %v448 = vld [vmem:[#allocation7 + $0x8b0] sm:$0xff]
    %v449 = vld [vmem:[#allocation7 + $0x8b8] sm:$0xff]
    %v450 = vld [vmem:[#allocation7 + $0x8c0] sm:$0xff]
    %v451 = vld [vmem:[#allocation7 + $0x8c8] sm:$0xff]
    %v452 = vld [vmem:[#allocation7 + $0x8d0] sm:$0xff]
    %v453 = vld [vmem:[#allocation7 + $0x8d8] sm:$0xff]
    %v454 = vld [vmem:[#allocation7 + $0x8e0] sm:$0xff]
    %v455 = vld [vmem:[#allocation7 + $0x8e8] sm:$0xff]
    %v456 = vld [vmem:[#allocation7 + $0x8f0] sm:$0xff]
    %v457 = vld [vmem:[#allocation7 + $0x8f8] sm:$0xff]
    %v458 = vld [vmem:[#allocation7 + $0x900] sm:$0xff]
    %v459 = vld [vmem:[#allocation7 + $0x908] sm:$0xff]
    %v460 = vld [vmem:[#allocation7 + $0x910] sm:$0xff]
    %v461 = vld [vmem:[#allocation7 + $0x918] sm:$0xff]
    %v462 = vld [vmem:[#allocation7 + $0x920] sm:$0xff]
    %v463 = vld [vmem:[#allocation7 + $0x928] sm:$0xff]
    %v464 = vld [vmem:[#allocation7 + $0x930] sm:$0xff]
    %v465 = vld [vmem:[#allocation7 + $0x938] sm:$0xff]
    %v466 = vld [vmem:[#allocation7 + $0x940] sm:$0xff]
    %v467 = vld [vmem:[#allocation7 + $0x948] sm:$0xff]
    %v468 = vld [vmem:[#allocation7 + $0x950] sm:$0xff]
    %v469 = vld [vmem:[#allocation7 + $0x958] sm:$0xff]
    %v470 = vld [vmem:[#allocation7 + $0x960] sm:$0xff]
    %v471 = vld [vmem:[#allocation7 + $0x968] sm:$0xff]
    %v472 = vld [vmem:[#allocation7 + $0x970] sm:$0xff]
    %v473 = vld [vmem:[#allocation7 + $0x978] sm:$0xff]
    %v474 = vld [vmem:[#allocation7 + $0x980] sm:$0xff]
    %v475 = vld [vmem:[#allocation7 + $0x988] sm:$0xff]
    %v476 = vld [vmem:[#allocation7 + $0x990] sm:$0xff]
    %v477 = vld [vmem:[#allocation7 + $0x998] sm:$0xff]
    %v478 = vld [vmem:[#allocation7 + $0x9a0] sm:$0xff]
    %v479 = vld [vmem:[#allocation7 + $0x9a8] sm:$0xff]
    %v480 = vld [vmem:[#allocation7 + $0x9b0] sm:$0xff]
    %v481 = vld [vmem:[#allocation7 + $0x9b8] sm:$0xff]
    %v482 = vld [vmem:[#allocation7 + $0x9c0] sm:$0xff]
    %v483 = vld [vmem:[#allocation7 + $0x9c8] sm:$0xff]
    %v484 = vld [vmem:[#allocation7 + $0x9d0] sm:$0xff]
    %v485 = vld [vmem:[#allocation7 + $0x9d8] sm:$0xff]
    %v486 = vld [vmem:[#allocation7 + $0x9e0] sm:$0xff]
    %v487 = vld [vmem:[#allocation7 + $0x9e8] sm:$0xff]
    %v488 = vld [vmem:[#allocation7 + $0x9f0] sm:$0xff]
    %v489 = vld [vmem:[#allocation7 + $0x9f8] sm:$0xff]
    %v490 = vld [vmem:[#allocation7 + $0xa00] sm:$0xff]
    %v491 = vld [vmem:[#allocation7 + $0xa08] sm:$0xff]
    %v492 = vld [vmem:[#allocation7 + $0xa10] sm:$0xff]
    %v493 = vld [vmem:[#allocation7 + $0xa18] sm:$0xff]
    %v494 = vld [vmem:[#allocation7 + $0xa20] sm:$0xff]
    %v495 = vld [vmem:[#allocation7 + $0xa28] sm:$0xff]
    %v496 = vld [vmem:[#allocation7 + $0xa30] sm:$0xff]
    %v497 = vld [vmem:[#allocation7 + $0xa38] sm:$0xff]
    %v498 = vld [vmem:[#allocation7 + $0xa40] sm:$0xff]
    %v499 = vld [vmem:[#allocation7 + $0xa48] sm:$0xff]
    %v500 = vld [vmem:[#allocation7 + $0xa50] sm:$0xff]
    %v501 = vld [vmem:[#allocation7 + $0xa58] sm:$0xff]
    %v502 = vld [vmem:[#allocation7 + $0xa60] sm:$0xff]
    %v503 = vld [vmem:[#allocation7 + $0xa68] sm:$0xff]
    %v504 = vld [vmem:[#allocation7 + $0xa70] sm:$0xff]
    %v505 = vld [vmem:[#allocation7 + $0xa78] sm:$0xff]
    %v506 = vld [vmem:[#allocation7 + $0xa80] sm:$0xff]
    %v507 = vld [vmem:[#allocation7 + $0xa88] sm:$0xff]
    %v508 = vld [vmem:[#allocation7 + $0xa90] sm:$0xff]
    %v509 = vld [vmem:[#allocation7 + $0xa98] sm:$0xff]
    %v510 = vld [vmem:[#allocation7 + $0xaa0] sm:$0xff]
    %v511 = vld [vmem:[#allocation7 + $0xaa8] sm:$0xff]
    %v512 = vld [vmem:[#allocation7 + $0xab0] sm:$0xff]
    %v513 = vld [vmem:[#allocation7 + $0xab8] sm:$0xff]
    %v514 = vld [vmem:[#allocation7 + $0xac0] sm:$0xff]
    %v515 = vld [vmem:[#allocation7 + $0xac8] sm:$0xff]
    %v516 = vld [vmem:[#allocation7 + $0xad0] sm:$0xff]
    %v517 = vld [vmem:[#allocation7 + $0xad8] sm:$0xff]
    %v518 = vld [vmem:[#allocation7 + $0xae0] sm:$0xff]
    %v519 = vld [vmem:[#allocation7 + $0xae8] sm:$0xff]
    %v520 = vld [vmem:[#allocation7 + $0xaf0] sm:$0xff]
    %v521 = vld [vmem:[#allocation7 + $0xaf8] sm:$0xff]
    %v522 = vld [vmem:[#allocation7 + $0xb00] sm:$0xff]
    %v523 = vld [vmem:[#allocation7 + $0xb08] sm:$0xff]
    %v524 = vld [vmem:[#allocation7 + $0xb10] sm:$0xff]
    %v525 = vld [vmem:[#allocation7 + $0xb18] sm:$0xff]
    %v526 = vld [vmem:[#allocation7 + $0xb20] sm:$0xff]
    %v527 = vld [vmem:[#allocation7 + $0xb28] sm:$0xff]
    %v528 = vld [vmem:[#allocation7 + $0xb30] sm:$0xff]
    %v529 = vld [vmem:[#allocation7 + $0xb38] sm:$0xff]
    %v530 = vld [vmem:[#allocation7 + $0xb40] sm:$0xff]
    %v531 = vld [vmem:[#allocation7 + $0xb48] sm:$0xff]
    %v532 = vld [vmem:[#allocation7 + $0xb50] sm:$0xff]
    %v533 = vld [vmem:[#allocation7 + $0xb58] sm:$0xff]
    %v534 = vld [vmem:[#allocation7 + $0xb60] sm:$0xff]
    %v535 = vld [vmem:[#allocation7 + $0xb68] sm:$0xff]
    %v536 = vld [vmem:[#allocation7 + $0xb70] sm:$0xff]
    %v537 = vld [vmem:[#allocation7 + $0xb78] sm:$0xff]
    %v538 = vld [vmem:[#allocation7 + $0xb80] sm:$0xff]
    %v539 = vld [vmem:[#allocation7 + $0xb88] sm:$0xff]
    %v540 = vld [vmem:[#allocation7 + $0xb90] sm:$0xff]
    %v541 = vld [vmem:[#allocation7 + $0xb98] sm:$0xff]
    %v542 = vld [vmem:[#allocation7 + $0xba0] sm:$0xff]
    %v543 = vld [vmem:[#allocation7 + $0xba8] sm:$0xff]
    %v544 = vld [vmem:[#allocation7 + $0xbb0] sm:$0xff]
    %v545 = vld [vmem:[#allocation7 + $0xbb8] sm:$0xff]
    %v546 = vld [vmem:[#allocation7 + $0xbc0] sm:$0xff]
    %v547 = vld [vmem:[#allocation7 + $0xbc8] sm:$0xff]
    %v548 = vld [vmem:[#allocation7 + $0xbd0] sm:$0xff]
    %v549 = vld [vmem:[#allocation7 + $0xbd8] sm:$0xff]
    %v550 = vld [vmem:[#allocation7 + $0xbe0] sm:$0xff]
    %v551 = vld [vmem:[#allocation7 + $0xbe8] sm:$0xff]
    %v552 = vld [vmem:[#allocation7 + $0xbf0] sm:$0xff]
    %v553 = vld [vmem:[#allocation7 + $0xbf8] sm:$0xff]
    %v554 = vld [vmem:[#allocation9] sm:$0x1]
    %v555 = vmul.f32 %v143, %v554
    %s556 = scalar_lea.vmem [#allocation9], 1
    %v557 = vld [vmem:[%s556] sm:$0x1]
    %v558 = vmul.f32 %v152, %v557
    %v559 = vadd.f32 %v555, %v558
    %s560 = scalar_lea.vmem [#allocation9], 2
    %v561 = vld [vmem:[%s560] sm:$0x1]
    %v562 = vmul.f32 %v161, %v561
    %v563 = vadd.f32 %v559, %v562
    %v565 = vlaneseq
    %v566 = vshrl.u32 %v565, 7
    %v567 = vsub.s32 0, %v566
    %v568 = vrot.slane %v563, %v567
    %570 = vmatprep.subr.mxu0 0.0
    %571 = vmatpush1.msra.mxu0 %v170
    %572 = vmatprep.subr.mxu0 0.0
    %573 = vmatpush1.msra.mxu0 %v171
    %574 = vmatprep.subr.mxu0 0.0
    %575 = vmatpush1.msra.mxu0 %v172
    %576 = vmatprep.subr.mxu0 0.0
    %577 = vmatpush1.msra.mxu0 %v173
    %578 = vmatprep.subr.mxu0 0.0
    %579 = vmatpush1.msra.mxu0 %v174
    %580 = vmatprep.subr.mxu0 0.0
    %581 = vmatpush1.msra.mxu0 %v175
    %582 = vmatprep.subr.mxu0 0.0
    %583 = vmatpush1.msra.mxu0 %v176
    %584 = vmatprep.subr.mxu0 0.0
    %585 = vmatpush1.msra.mxu0 %v177
    %586 = vmatprep.subr.mxu0 0.0
    %587 = vmatpush1.msra.mxu0 %v178
    %588 = vmatprep.subr.mxu0 0.0
    %589 = vmatpush1.msra.mxu0 %v179
    %590 = vmatprep.subr.mxu0 0.0
    %591 = vmatpush1.msra.mxu0 %v180
    %592 = vmatprep.subr.mxu0 0.0
    %593 = vmatpush1.msra.mxu0 %v181
    %594 = vmatprep.subr.mxu0 0.0
    %595 = vmatpush1.msra.mxu0 %v182
    %596 = vmatprep.subr.mxu0 0.0
    %597 = vmatpush1.msra.mxu0 %v183
    %598 = vmatprep.subr.mxu0 0.0
    %599 = vmatpush1.msra.mxu0 %v184
    %600 = vmatprep.subr.mxu0 0.0
    %601 = vmatpush1.msra.mxu0 %v185
    %602 = vmatprep.subr.mxu0 0.0
    %603 = vmatpush1.msra.mxu0 %v186
    %604 = vmatprep.subr.mxu0 0.0
    %605 = vmatpush1.msra.mxu0 %v187
    %606 = vmatprep.subr.mxu0 0.0
    %607 = vmatpush1.msra.mxu0 %v188
    %608 = vmatprep.subr.mxu0 0.0
    %609 = vmatpush1.msra.mxu0 %v189
    %610 = vmatprep.subr.mxu0 0.0
    %611 = vmatpush1.msra.mxu0 %v190
    %612 = vmatprep.subr.mxu0 0.0
    %613 = vmatpush1.msra.mxu0 %v191
    %614 = vmatprep.subr.mxu0 0.0
    %615 = vmatpush1.msra.mxu0 %v192
    %616 = vmatprep.subr.mxu0 0.0
    %617 = vmatpush1.msra.mxu0 %v193
    %618 = vmatprep.subr.mxu0 0.0
    %619 = vmatpush1.msra.mxu0 %v194
    %620 = vmatprep.subr.mxu0 0.0
    %621 = vmatpush1.msra.mxu0 %v195
    %622 = vmatprep.subr.mxu0 0.0
    %623 = vmatpush1.msra.mxu0 %v196
    %624 = vmatprep.subr.mxu0 0.0
    %625 = vmatpush1.msra.mxu0 %v197
    %626 = vmatprep.subr.mxu0 0.0
    %627 = vmatpush1.msra.mxu0 %v198
    %628 = vmatprep.subr.mxu0 0.0
    %629 = vmatpush1.msra.mxu0 %v199
    %630 = vmatprep.subr.mxu0 0.0
    %631 = vmatpush1.msra.mxu0 %v200
    %632 = vmatprep.subr.mxu0 0.0
    %633 = vmatpush1.msra.mxu0 %v201
    %634 = vmatprep.mubr.f32.mxu0 %v145
    %635 = vmatmul.mubr.f32.gmra.mrb[0].mxu0 %v144
    %v636 = vpop.f32.mrb[0].mxu0
    %v637 = vadd.f32 %v568, %v636
    %v638 = vpop.f32.mrb[0].mxu0
    %639 = vdwg.mxu0
    %640 = vmatprep.subr.mxu0 0.0
    %641 = vmatpush1.msra.mxu0 %v202
    %642 = vmatprep.subr.mxu0 0.0
    %643 = vmatpush1.msra.mxu0 %v203
    %644 = vmatprep.subr.mxu0 0.0
    %645 = vmatpush1.msra.mxu0 %v204
    %646 = vmatprep.subr.mxu0 0.0
    %647 = vmatpush1.msra.mxu0 %v205
    %648 = vmatprep.subr.mxu0 0.0
    %649 = vmatpush1.msra.mxu0 %v206
    %650 = vmatprep.subr.mxu0 0.0
    %651 = vmatpush1.msra.mxu0 %v207
    %652 = vmatprep.subr.mxu0 0.0
    %653 = vmatpush1.msra.mxu0 %v208
    %654 = vmatprep.subr.mxu0 0.0
    %655 = vmatpush1.msra.mxu0 %v209
    %656 = vmatprep.subr.mxu0 0.0
    %657 = vmatpush1.msra.mxu0 %v210
    %658 = vmatprep.subr.mxu0 0.0
    %659 = vmatpush1.msra.mxu0 %v211
    %660 = vmatprep.subr.mxu0 0.0
    %661 = vmatpush1.msra.mxu0 %v212
    %662 = vmatprep.subr.mxu0 0.0
    %663 = vmatpush1.msra.mxu0 %v213
    %664 = vmatprep.subr.mxu0 0.0
    %665 = vmatpush1.msra.mxu0 %v214
    %666 = vmatprep.subr.mxu0 0.0
    %667 = vmatpush1.msra.mxu0 %v215
    %668 = vmatprep.subr.mxu0 0.0
    %669 = vmatpush1.msra.mxu0 %v216
    %670 = vmatprep.subr.mxu0 0.0
    %671 = vmatpush1.msra.mxu0 %v217
    %672 = vmatprep.subr.mxu0 0.0
    %673 = vmatpush1.msra.mxu0 %v218
    %674 = vmatprep.subr.mxu0 0.0
    %675 = vmatpush1.msra.mxu0 %v219
    %676 = vmatprep.subr.mxu0 0.0
    %677 = vmatpush1.msra.mxu0 %v220
    %678 = vmatprep.subr.mxu0 0.0
    %679 = vmatpush1.msra.mxu0 %v221
    %680 = vmatprep.subr.mxu0 0.0
    %681 = vmatpush1.msra.mxu0 %v222
    %682 = vmatprep.subr.mxu0 0.0
    %683 = vmatpush1.msra.mxu0 %v223
    %684 = vmatprep.subr.mxu0 0.0
    %685 = vmatpush1.msra.mxu0 %v224
    %686 = vmatprep.subr.mxu0 0.0
    %687 = vmatpush1.msra.mxu0 %v225
    %688 = vmatprep.subr.mxu0 0.0
    %689 = vmatpush1.msra.mxu0 %v226
    %690 = vmatprep.subr.mxu0 0.0
    %691 = vmatpush1.msra.mxu0 %v227
    %692 = vmatprep.subr.mxu0 0.0
    %693 = vmatpush1.msra.mxu0 %v228
    %694 = vmatprep.subr.mxu0 0.0
    %695 = vmatpush1.msra.mxu0 %v229
    %696 = vmatprep.subr.mxu0 0.0
    %697 = vmatpush1.msra.mxu0 %v230
    %698 = vmatprep.subr.mxu0 0.0
    %699 = vmatpush1.msra.mxu0 %v231
    %700 = vmatprep.subr.mxu0 0.0
    %701 = vmatpush1.msra.mxu0 %v232
    %702 = vmatprep.subr.mxu0 0.0
    %703 = vmatpush1.msra.mxu0 %v233
    %704 = vmatprep.mubr.f32.mxu0 %v147
    %705 = vmatmul.mubr.f32.gmra.mrb[0].mxu0 %v146
    %v706 = vpop.f32.mrb[0].mxu0
    %v707 = vadd.f32 %v637, %v706
    %v708 = vpop.f32.mrb[0].mxu0
    %709 = vdwg.mxu0
    %710 = vmatprep.subr.mxu0 0.0
    %711 = vmatpush1.msra.mxu0 %v234
    %712 = vmatprep.subr.mxu0 0.0
    %713 = vmatpush1.msra.mxu0 %v235
    %714 = vmatprep.subr.mxu0 0.0
    %715 = vmatpush1.msra.mxu0 %v236
    %716 = vmatprep.subr.mxu0 0.0
    %717 = vmatpush1.msra.mxu0 %v237
    %718 = vmatprep.subr.mxu0 0.0
    %719 = vmatpush1.msra.mxu0 %v238
    %720 = vmatprep.subr.mxu0 0.0
    %721 = vmatpush1.msra.mxu0 %v239
    %722 = vmatprep.subr.mxu0 0.0
    %723 = vmatpush1.msra.mxu0 %v240
    %724 = vmatprep.subr.mxu0 0.0
    %725 = vmatpush1.msra.mxu0 %v241
    %726 = vmatprep.subr.mxu0 0.0
    %727 = vmatpush1.msra.mxu0 %v242
    %728 = vmatprep.subr.mxu0 0.0
    %729 = vmatpush1.msra.mxu0 %v243
    %730 = vmatprep.subr.mxu0 0.0
    %731 = vmatpush1.msra.mxu0 %v244
    %732 = vmatprep.subr.mxu0 0.0
    %733 = vmatpush1.msra.mxu0 %v245
    %734 = vmatprep.subr.mxu0 0.0
    %735 = vmatpush1.msra.mxu0 %v246
    %736 = vmatprep.subr.mxu0 0.0
    %737 = vmatpush1.msra.mxu0 %v247
    %738 = vmatprep.subr.mxu0 0.0
    %739 = vmatpush1.msra.mxu0 %v248
    %740 = vmatprep.subr.mxu0 0.0
    %741 = vmatpush1.msra.mxu0 %v249
    %742 = vmatprep.subr.mxu0 0.0
    %743 = vmatpush1.msra.mxu0 %v250
    %744 = vmatprep.subr.mxu0 0.0
    %745 = vmatpush1.msra.mxu0 %v251
    %746 = vmatprep.subr.mxu0 0.0
    %747 = vmatpush1.msra.mxu0 %v252
    %748 = vmatprep.subr.mxu0 0.0
    %749 = vmatpush1.msra.mxu0 %v253
    %750 = vmatprep.subr.mxu0 0.0
    %751 = vmatpush1.msra.mxu0 %v254
    %752 = vmatprep.subr.mxu0 0.0
    %753 = vmatpush1.msra.mxu0 %v255
    %754 = vmatprep.subr.mxu0 0.0
    %755 = vmatpush1.msra.mxu0 %v256
    %756 = vmatprep.subr.mxu0 0.0
    %757 = vmatpush1.msra.mxu0 %v257
    %758 = vmatprep.subr.mxu0 0.0
    %759 = vmatpush1.msra.mxu0 %v258
    %760 = vmatprep.subr.mxu0 0.0
    %761 = vmatpush1.msra.mxu0 %v259
    %762 = vmatprep.subr.mxu0 0.0
    %763 = vmatpush1.msra.mxu0 %v260
    %764 = vmatprep.subr.mxu0 0.0
    %765 = vmatpush1.msra.mxu0 %v261
    %766 = vmatprep.subr.mxu0 0.0
    %767 = vmatpush1.msra.mxu0 %v262
    %768 = vmatprep.subr.mxu0 0.0
    %769 = vmatpush1.msra.mxu0 %v263
    %770 = vmatprep.subr.mxu0 0.0
    %771 = vmatpush1.msra.mxu0 %v264
    %772 = vmatprep.subr.mxu0 0.0
    %773 = vmatpush1.msra.mxu0 %v265
    %774 = vmatprep.mubr.f32.mxu0 %v149
    %775 = vmatmul.mubr.f32.gmra.mrb[0].mxu0 %v148
    %v776 = vpop.f32.mrb[0].mxu0
    %v777 = vadd.f32 %v707, %v776
    %v778 = vpop.f32.mrb[0].mxu0
    %779 = vdwg.mxu0
    %780 = vmatprep.subr.mxu0 0.0
    %781 = vmatpush1.msra.mxu0 %v266
    %782 = vmatprep.subr.mxu0 0.0
    %783 = vmatpush1.msra.mxu0 %v267
    %784 = vmatprep.subr.mxu0 0.0
    %785 = vmatpush1.msra.mxu0 %v268
    %786 = vmatprep.subr.mxu0 0.0
    %787 = vmatpush1.msra.mxu0 %v269
    %788 = vmatprep.subr.mxu0 0.0
    %789 = vmatpush1.msra.mxu0 %v270
    %790 = vmatprep.subr.mxu0 0.0
    %791 = vmatpush1.msra.mxu0 %v271
    %792 = vmatprep.subr.mxu0 0.0
    %793 = vmatpush1.msra.mxu0 %v272
    %794 = vmatprep.subr.mxu0 0.0
    %795 = vmatpush1.msra.mxu0 %v273
    %796 = vmatprep.subr.mxu0 0.0
    %797 = vmatpush1.msra.mxu0 %v274
    %798 = vmatprep.subr.mxu0 0.0
    %799 = vmatpush1.msra.mxu0 %v275
    %800 = vmatprep.subr.mxu0 0.0
    %801 = vmatpush1.msra.mxu0 %v276
    %802 = vmatprep.subr.mxu0 0.0
    %803 = vmatpush1.msra.mxu0 %v277
    %804 = vmatprep.subr.mxu0 0.0
    %805 = vmatpush1.msra.mxu0 %v278
    %806 = vmatprep.subr.mxu0 0.0
    %807 = vmatpush1.msra.mxu0 %v279
    %808 = vmatprep.subr.mxu0 0.0
    %809 = vmatpush1.msra.mxu0 %v280
    %810 = vmatprep.subr.mxu0 0.0
    %811 = vmatpush1.msra.mxu0 %v281
    %812 = vmatprep.subr.mxu0 0.0
    %813 = vmatpush1.msra.mxu0 %v282
    %814 = vmatprep.subr.mxu0 0.0
    %815 = vmatpush1.msra.mxu0 %v283
    %816 = vmatprep.subr.mxu0 0.0
    %817 = vmatpush1.msra.mxu0 %v284
    %818 = vmatprep.subr.mxu0 0.0
    %819 = vmatpush1.msra.mxu0 %v285
    %820 = vmatprep.subr.mxu0 0.0
    %821 = vmatpush1.msra.mxu0 %v286
    %822 = vmatprep.subr.mxu0 0.0
    %823 = vmatpush1.msra.mxu0 %v287
    %824 = vmatprep.subr.mxu0 0.0
    %825 = vmatpush1.msra.mxu0 %v288
    %826 = vmatprep.subr.mxu0 0.0
    %827 = vmatpush1.msra.mxu0 %v289
    %828 = vmatprep.subr.mxu0 0.0
    %829 = vmatpush1.msra.mxu0 %v290
    %830 = vmatprep.subr.mxu0 0.0
    %831 = vmatpush1.msra.mxu0 %v291
    %832 = vmatprep.subr.mxu0 0.0
    %833 = vmatpush1.msra.mxu0 %v292
    %834 = vmatprep.subr.mxu0 0.0
    %835 = vmatpush1.msra.mxu0 %v293
    %836 = vmatprep.subr.mxu0 0.0
    %837 = vmatpush1.msra.mxu0 %v294
    %838 = vmatprep.subr.mxu0 0.0
    %839 = vmatpush1.msra.mxu0 %v295
    %840 = vmatprep.subr.mxu0 0.0
    %841 = vmatpush1.msra.mxu0 %v296
    %842 = vmatprep.subr.mxu0 0.0
    %843 = vmatpush1.msra.mxu0 %v297
    %844 = vmatprep.mubr.f32.mxu0 %v151
    %845 = vmatmul.mubr.f32.gmra.mrb[0].mxu0 %v150
    %v846 = vpop.f32.mrb[0].mxu0
    %v847 = vadd.f32 %v777, %v846
    %v848 = vpop.f32.mrb[0].mxu0
    %849 = vdwg.mxu0
    %850 = vmatprep.subr.mxu0 0.0
    %851 = vmatpush1.msra.mxu0 %v298
    %852 = vmatprep.subr.mxu0 0.0
    %853 = vmatpush1.msra.mxu0 %v299
    %854 = vmatprep.subr.mxu0 0.0
    %855 = vmatpush1.msra.mxu0 %v300
    %856 = vmatprep.subr.mxu0 0.0
    %857 = vmatpush1.msra.mxu0 %v301
    %858 = vmatprep.subr.mxu0 0.0
    %859 = vmatpush1.msra.mxu0 %v302
    %860 = vmatprep.subr.mxu0 0.0
    %861 = vmatpush1.msra.mxu0 %v303
    %862 = vmatprep.subr.mxu0 0.0
    %863 = vmatpush1.msra.mxu0 %v304
    %864 = vmatprep.subr.mxu0 0.0
    %865 = vmatpush1.msra.mxu0 %v305
    %866 = vmatprep.subr.mxu0 0.0
    %867 = vmatpush1.msra.mxu0 %v306
    %868 = vmatprep.subr.mxu0 0.0
    %869 = vmatpush1.msra.mxu0 %v307
    %870 = vmatprep.subr.mxu0 0.0
    %871 = vmatpush1.msra.mxu0 %v308
    %872 = vmatprep.subr.mxu0 0.0
    %873 = vmatpush1.msra.mxu0 %v309
    %874 = vmatprep.subr.mxu0 0.0
    %875 = vmatpush1.msra.mxu0 %v310
    %876 = vmatprep.subr.mxu0 0.0
    %877 = vmatpush1.msra.mxu0 %v311
    %878 = vmatprep.subr.mxu0 0.0
    %879 = vmatpush1.msra.mxu0 %v312
    %880 = vmatprep.subr.mxu0 0.0
    %881 = vmatpush1.msra.mxu0 %v313
    %882 = vmatprep.subr.mxu0 0.0
    %883 = vmatpush1.msra.mxu0 %v314
    %884 = vmatprep.subr.mxu0 0.0
    %885 = vmatpush1.msra.mxu0 %v315
    %886 = vmatprep.subr.mxu0 0.0
    %887 = vmatpush1.msra.mxu0 %v316
    %888 = vmatprep.subr.mxu0 0.0
    %889 = vmatpush1.msra.mxu0 %v317
    %890 = vmatprep.subr.mxu0 0.0
    %891 = vmatpush1.msra.mxu0 %v318
    %892 = vmatprep.subr.mxu0 0.0
    %893 = vmatpush1.msra.mxu0 %v319
    %894 = vmatprep.subr.mxu0 0.0
    %895 = vmatpush1.msra.mxu0 %v320
    %896 = vmatprep.subr.mxu0 0.0
    %897 = vmatpush1.msra.mxu0 %v321
    %898 = vmatprep.subr.mxu0 0.0
    %899 = vmatpush1.msra.mxu0 %v322
    %900 = vmatprep.subr.mxu0 0.0
    %901 = vmatpush1.msra.mxu0 %v323
    %902 = vmatprep.subr.mxu0 0.0
    %903 = vmatpush1.msra.mxu0 %v324
    %904 = vmatprep.subr.mxu0 0.0
    %905 = vmatpush1.msra.mxu0 %v325
    %906 = vmatprep.subr.mxu0 0.0
    %907 = vmatpush1.msra.mxu0 %v326
    %908 = vmatprep.subr.mxu0 0.0
    %909 = vmatpush1.msra.mxu0 %v327
    %910 = vmatprep.subr.mxu0 0.0
    %911 = vmatpush1.msra.mxu0 %v328
    %912 = vmatprep.subr.mxu0 0.0
    %913 = vmatpush1.msra.mxu0 %v329
    %914 = vmatprep.mubr.f32.mxu0 %v154
    %915 = vmatmul.mubr.f32.gmra.mrb[0].mxu0 %v153
    %v916 = vpop.f32.mrb[0].mxu0
    %v917 = vadd.f32 %v847, %v916
    %v918 = vpop.f32.mrb[0].mxu0
    %919 = vdwg.mxu0
    %920 = vmatprep.subr.mxu0 0.0
    %921 = vmatpush1.msra.mxu0 %v330
    %922 = vmatprep.subr.mxu0 0.0
    %923 = vmatpush1.msra.mxu0 %v331
    %924 = vmatprep.subr.mxu0 0.0
    %925 = vmatpush1.msra.mxu0 %v332
    %926 = vmatprep.subr.mxu0 0.0
    %927 = vmatpush1.msra.mxu0 %v333
    %928 = vmatprep.subr.mxu0 0.0
    %929 = vmatpush1.msra.mxu0 %v334
    %930 = vmatprep.subr.mxu0 0.0
    %931 = vmatpush1.msra.mxu0 %v335
    %932 = vmatprep.subr.mxu0 0.0
    %933 = vmatpush1.msra.mxu0 %v336
    %934 = vmatprep.subr.mxu0 0.0
    %935 = vmatpush1.msra.mxu0 %v337
    %936 = vmatprep.subr.mxu0 0.0
    %937 = vmatpush1.msra.mxu0 %v338
    %938 = vmatprep.subr.mxu0 0.0
    %939 = vmatpush1.msra.mxu0 %v339
    %940 = vmatprep.subr.mxu0 0.0
    %941 = vmatpush1.msra.mxu0 %v340
    %942 = vmatprep.subr.mxu0 0.0
    %943 = vmatpush1.msra.mxu0 %v341
    %944 = vmatprep.subr.mxu0 0.0
    %945 = vmatpush1.msra.mxu0 %v342
    %946 = vmatprep.subr.mxu0 0.0
    %947 = vmatpush1.msra.mxu0 %v343
    %948 = vmatprep.subr.mxu0 0.0
    %949 = vmatpush1.msra.mxu0 %v344
    %950 = vmatprep.subr.mxu0 0.0
    %951 = vmatpush1.msra.mxu0 %v345
    %952 = vmatprep.subr.mxu0 0.0
    %953 = vmatpush1.msra.mxu0 %v346
    %954 = vmatprep.subr.mxu0 0.0
    %955 = vmatpush1.msra.mxu0 %v347
    %956 = vmatprep.subr.mxu0 0.0
    %957 = vmatpush1.msra.mxu0 %v348
    %958 = vmatprep.subr.mxu0 0.0
    %959 = vmatpush1.msra.mxu0 %v349
    %960 = vmatprep.subr.mxu0 0.0
    %961 = vmatpush1.msra.mxu0 %v350
    %962 = vmatprep.subr.mxu0 0.0
    %963 = vmatpush1.msra.mxu0 %v351
    %964 = vmatprep.subr.mxu0 0.0
    %965 = vmatpush1.msra.mxu0 %v352
    %966 = vmatprep.subr.mxu0 0.0
    %967 = vmatpush1.msra.mxu0 %v353
    %968 = vmatprep.subr.mxu0 0.0
    %969 = vmatpush1.msra.mxu0 %v354
    %970 = vmatprep.subr.mxu0 0.0
    %971 = vmatpush1.msra.mxu0 %v355
    %972 = vmatprep.subr.mxu0 0.0
    %973 = vmatpush1.msra.mxu0 %v356
    %974 = vmatprep.subr.mxu0 0.0
    %975 = vmatpush1.msra.mxu0 %v357
    %976 = vmatprep.subr.mxu0 0.0
    %977 = vmatpush1.msra.mxu0 %v358
    %978 = vmatprep.subr.mxu0 0.0
    %979 = vmatpush1.msra.mxu0 %v359
    %980 = vmatprep.subr.mxu0 0.0
    %981 = vmatpush1.msra.mxu0 %v360
    %982 = vmatprep.subr.mxu0 0.0
    %983 = vmatpush1.msra.mxu0 %v361
    %984 = vmatprep.mubr.f32.mxu0 %v156
    %985 = vmatmul.mubr.f32.gmra.mrb[0].mxu0 %v155
    %v986 = vpop.f32.mrb[0].mxu0
    %v987 = vadd.f32 %v917, %v986
    %v988 = vpop.f32.mrb[0].mxu0
    %989 = vdwg.mxu0
    %990 = vmatprep.subr.mxu0 0.0
    %991 = vmatpush1.msra.mxu0 %v362
    %992 = vmatprep.subr.mxu0 0.0
    %993 = vmatpush1.msra.mxu0 %v363
    %994 = vmatprep.subr.mxu0 0.0
    %995 = vmatpush1.msra.mxu0 %v364
    %996 = vmatprep.subr.mxu0 0.0
    %997 = vmatpush1.msra.mxu0 %v365
    %998 = vmatprep.subr.mxu0 0.0
    %999 = vmatpush1.msra.mxu0 %v366
    %1000 = vmatprep.subr.mxu0 0.0
    %1001 = vmatpush1.msra.mxu0 %v367
    %1002 = vmatprep.subr.mxu0 0.0
    %1003 = vmatpush1.msra.mxu0 %v368
    %1004 = vmatprep.subr.mxu0 0.0
    %1005 = vmatpush1.msra.mxu0 %v369
    %1006 = vmatprep.subr.mxu0 0.0
    %1007 = vmatpush1.msra.mxu0 %v370
    %1008 = vmatprep.subr.mxu0 0.0
    %1009 = vmatpush1.msra.mxu0 %v371
    %1010 = vmatprep.subr.mxu0 0.0
    %1011 = vmatpush1.msra.mxu0 %v372
    %1012 = vmatprep.subr.mxu0 0.0
    %1013 = vmatpush1.msra.mxu0 %v373
    %1014 = vmatprep.subr.mxu0 0.0
    %1015 = vmatpush1.msra.mxu0 %v374
    %1016 = vmatprep.subr.mxu0 0.0
    %1017 = vmatpush1.msra.mxu0 %v375
    %1018 = vmatprep.subr.mxu0 0.0
    %1019 = vmatpush1.msra.mxu0 %v376
    %1020 = vmatprep.subr.mxu0 0.0
    %1021 = vmatpush1.msra.mxu0 %v377
    %1022 = vmatprep.subr.mxu0 0.0
    %1023 = vmatpush1.msra.mxu0 %v378
    %1024 = vmatprep.subr.mxu0 0.0
    %1025 = vmatpush1.msra.mxu0 %v379
    %1026 = vmatprep.subr.mxu0 0.0
    %1027 = vmatpush1.msra.mxu0 %v380
    %1028 = vmatprep.subr.mxu0 0.0
    %1029 = vmatpush1.msra.mxu0 %v381
    %1030 = vmatprep.subr.mxu0 0.0
    %1031 = vmatpush1.msra.mxu0 %v382
    %1032 = vmatprep.subr.mxu0 0.0
    %1033 = vmatpush1.msra.mxu0 %v383
    %1034 = vmatprep.subr.mxu0 0.0
    %1035 = vmatpush1.msra.mxu0 %v384
    %1036 = vmatprep.subr.mxu0 0.0
    %1037 = vmatpush1.msra.mxu0 %v385
    %1038 = vmatprep.subr.mxu0 0.0
    %1039 = vmatpush1.msra.mxu0 %v386
    %1040 = vmatprep.subr.mxu0 0.0
    %1041 = vmatpush1.msra.mxu0 %v387
    %1042 = vmatprep.subr.mxu0 0.0
    %1043 = vmatpush1.msra.mxu0 %v388
    %1044 = vmatprep.subr.mxu0 0.0
    %1045 = vmatpush1.msra.mxu0 %v389
    %1046 = vmatprep.subr.mxu0 0.0
    %1047 = vmatpush1.msra.mxu0 %v390
    %1048 = vmatprep.subr.mxu0 0.0
    %1049 = vmatpush1.msra.mxu0 %v391
    %1050 = vmatprep.subr.mxu0 0.0
    %1051 = vmatpush1.msra.mxu0 %v392
    %1052 = vmatprep.subr.mxu0 0.0
    %1053 = vmatpush1.msra.mxu0 %v393
    %1054 = vmatprep.mubr.f32.mxu0 %v158
    %1055 = vmatmul.mubr.f32.gmra.mrb[0].mxu0 %v157
    %v1056 = vpop.f32.mrb[0].mxu0
    %v1057 = vadd.f32 %v987, %v1056
    %v1058 = vpop.f32.mrb[0].mxu0
    %1059 = vdwg.mxu0
    %1060 = vmatprep.subr.mxu0 0.0
    %1061 = vmatpush1.msra.mxu0 %v394
    %1062 = vmatprep.subr.mxu0 0.0
    %1063 = vmatpush1.msra.mxu0 %v395
    %1064 = vmatprep.subr.mxu0 0.0
    %1065 = vmatpush1.msra.mxu0 %v396
    %1066 = vmatprep.subr.mxu0 0.0
    %1067 = vmatpush1.msra.mxu0 %v397
    %1068 = vmatprep.subr.mxu0 0.0
    %1069 = vmatpush1.msra.mxu0 %v398
    %1070 = vmatprep.subr.mxu0 0.0
    %1071 = vmatpush1.msra.mxu0 %v399
    %1072 = vmatprep.subr.mxu0 0.0
    %1073 = vmatpush1.msra.mxu0 %v400
    %1074 = vmatprep.subr.mxu0 0.0
    %1075 = vmatpush1.msra.mxu0 %v401
    %1076 = vmatprep.subr.mxu0 0.0
    %1077 = vmatpush1.msra.mxu0 %v402
    %1078 = vmatprep.subr.mxu0 0.0
    %1079 = vmatpush1.msra.mxu0 %v403
    %1080 = vmatprep.subr.mxu0 0.0
    %1081 = vmatpush1.msra.mxu0 %v404
    %1082 = vmatprep.subr.mxu0 0.0
    %1083 = vmatpush1.msra.mxu0 %v405
    %1084 = vmatprep.subr.mxu0 0.0
    %1085 = vmatpush1.msra.mxu0 %v406
    %1086 = vmatprep.subr.mxu0 0.0
    %1087 = vmatpush1.msra.mxu0 %v407
    %1088 = vmatprep.subr.mxu0 0.0
    %1089 = vmatpush1.msra.mxu0 %v408
    %1090 = vmatprep.subr.mxu0 0.0
    %1091 = vmatpush1.msra.mxu0 %v409
    %1092 = vmatprep.subr.mxu0 0.0
    %1093 = vmatpush1.msra.mxu0 %v410
    %1094 = vmatprep.subr.mxu0 0.0
    %1095 = vmatpush1.msra.mxu0 %v411
    %1096 = vmatprep.subr.mxu0 0.0
    %1097 = vmatpush1.msra.mxu0 %v412
    %1098 = vmatprep.subr.mxu0 0.0
    %1099 = vmatpush1.msra.mxu0 %v413
    %1100 = vmatprep.subr.mxu0 0.0
    %1101 = vmatpush1.msra.mxu0 %v414
    %1102 = vmatprep.subr.mxu0 0.0
    %1103 = vmatpush1.msra.mxu0 %v415
    %1104 = vmatprep.subr.mxu0 0.0
    %1105 = vmatpush1.msra.mxu0 %v416
    %1106 = vmatprep.subr.mxu0 0.0
    %1107 = vmatpush1.msra.mxu0 %v417
    %1108 = vmatprep.subr.mxu0 0.0
    %1109 = vmatpush1.msra.mxu0 %v418
    %1110 = vmatprep.subr.mxu0 0.0
    %1111 = vmatpush1.msra.mxu0 %v419
    %1112 = vmatprep.subr.mxu0 0.0
    %1113 = vmatpush1.msra.mxu0 %v420
    %1114 = vmatprep.subr.mxu0 0.0
    %1115 = vmatpush1.msra.mxu0 %v421
    %1116 = vmatprep.subr.mxu0 0.0
    %1117 = vmatpush1.msra.mxu0 %v422
    %1118 = vmatprep.subr.mxu0 0.0
    %1119 = vmatpush1.msra.mxu0 %v423
    %1120 = vmatprep.subr.mxu0 0.0
    %1121 = vmatpush1.msra.mxu0 %v424
    %1122 = vmatprep.subr.mxu0 0.0
    %1123 = vmatpush1.msra.mxu0 %v425
    %1124 = vmatprep.mubr.f32.mxu0 %v160
    %1125 = vmatmul.mubr.f32.gmra.mrb[0].mxu0 %v159
    %v1126 = vpop.f32.mrb[0].mxu0
    %v1127 = vadd.f32 %v1057, %v1126
    %v1128 = vpop.f32.mrb[0].mxu0
    %1129 = vdwg.mxu0
    %1130 = vmatprep.subr.mxu0 0.0
    %1131 = vmatpush1.msra.mxu0 %v426
    %1132 = vmatprep.subr.mxu0 0.0
    %1133 = vmatpush1.msra.mxu0 %v427
    %1134 = vmatprep.subr.mxu0 0.0
    %1135 = vmatpush1.msra.mxu0 %v428
    %1136 = vmatprep.subr.mxu0 0.0
    %1137 = vmatpush1.msra.mxu0 %v429
    %1138 = vmatprep.subr.mxu0 0.0
    %1139 = vmatpush1.msra.mxu0 %v430
    %1140 = vmatprep.subr.mxu0 0.0
    %1141 = vmatpush1.msra.mxu0 %v431
    %1142 = vmatprep.subr.mxu0 0.0
    %1143 = vmatpush1.msra.mxu0 %v432
    %1144 = vmatprep.subr.mxu0 0.0
    %1145 = vmatpush1.msra.mxu0 %v433
    %1146 = vmatprep.subr.mxu0 0.0
    %1147 = vmatpush1.msra.mxu0 %v434
    %1148 = vmatprep.subr.mxu0 0.0
    %1149 = vmatpush1.msra.mxu0 %v435
    %1150 = vmatprep.subr.mxu0 0.0
    %1151 = vmatpush1.msra.mxu0 %v436
    %1152 = vmatprep.subr.mxu0 0.0
    %1153 = vmatpush1.msra.mxu0 %v437
    %1154 = vmatprep.subr.mxu0 0.0
    %1155 = vmatpush1.msra.mxu0 %v438
    %1156 = vmatprep.subr.mxu0 0.0
    %1157 = vmatpush1.msra.mxu0 %v439
    %1158 = vmatprep.subr.mxu0 0.0
    %1159 = vmatpush1.msra.mxu0 %v440
    %1160 = vmatprep.subr.mxu0 0.0
    %1161 = vmatpush1.msra.mxu0 %v441
    %1162 = vmatprep.subr.mxu0 0.0
    %1163 = vmatpush1.msra.mxu0 %v442
    %1164 = vmatprep.subr.mxu0 0.0
    %1165 = vmatpush1.msra.mxu0 %v443
    %1166 = vmatprep.subr.mxu0 0.0
    %1167 = vmatpush1.msra.mxu0 %v444
    %1168 = vmatprep.subr.mxu0 0.0
    %1169 = vmatpush1.msra.mxu0 %v445
    %1170 = vmatprep.subr.mxu0 0.0
    %1171 = vmatpush1.msra.mxu0 %v446
    %1172 = vmatprep.subr.mxu0 0.0
    %1173 = vmatpush1.msra.mxu0 %v447
    %1174 = vmatprep.subr.mxu0 0.0
    %1175 = vmatpush1.msra.mxu0 %v448
    %1176 = vmatprep.subr.mxu0 0.0
    %1177 = vmatpush1.msra.mxu0 %v449
    %1178 = vmatprep.subr.mxu0 0.0
    %1179 = vmatpush1.msra.mxu0 %v450
    %1180 = vmatprep.subr.mxu0 0.0
    %1181 = vmatpush1.msra.mxu0 %v451
    %1182 = vmatprep.subr.mxu0 0.0
    %1183 = vmatpush1.msra.mxu0 %v452
    %1184 = vmatprep.subr.mxu0 0.0
    %1185 = vmatpush1.msra.mxu0 %v453
    %1186 = vmatprep.subr.mxu0 0.0
    %1187 = vmatpush1.msra.mxu0 %v454
    %1188 = vmatprep.subr.mxu0 0.0
    %1189 = vmatpush1.msra.mxu0 %v455
    %1190 = vmatprep.subr.mxu0 0.0
    %1191 = vmatpush1.msra.mxu0 %v456
    %1192 = vmatprep.subr.mxu0 0.0
    %1193 = vmatpush1.msra.mxu0 %v457
    %1194 = vmatprep.mubr.f32.mxu0 %v163
    %1195 = vmatmul.mubr.f32.gmra.mrb[0].mxu0 %v162
    %v1196 = vpop.f32.mrb[0].mxu0
    %v1197 = vadd.f32 %v1127, %v1196
    %v1198 = vpop.f32.mrb[0].mxu0
    %1199 = vdwg.mxu0
    %1200 = vmatprep.subr.mxu0 0.0
    %1201 = vmatpush1.msra.mxu0 %v458
    %1202 = vmatprep.subr.mxu0 0.0
    %1203 = vmatpush1.msra.mxu0 %v459
    %1204 = vmatprep.subr.mxu0 0.0
    %1205 = vmatpush1.msra.mxu0 %v460
    %1206 = vmatprep.subr.mxu0 0.0
    %1207 = vmatpush1.msra.mxu0 %v461
    %1208 = vmatprep.subr.mxu0 0.0
    %1209 = vmatpush1.msra.mxu0 %v462
    %1210 = vmatprep.subr.mxu0 0.0
    %1211 = vmatpush1.msra.mxu0 %v463
    %1212 = vmatprep.subr.mxu0 0.0
    %1213 = vmatpush1.msra.mxu0 %v464
    %1214 = vmatprep.subr.mxu0 0.0
    %1215 = vmatpush1.msra.mxu0 %v465
    %1216 = vmatprep.subr.mxu0 0.0
    %1217 = vmatpush1.msra.mxu0 %v466
    %1218 = vmatprep.subr.mxu0 0.0
    %1219 = vmatpush1.msra.mxu0 %v467
    %1220 = vmatprep.subr.mxu0 0.0
    %1221 = vmatpush1.msra.mxu0 %v468
    %1222 = vmatprep.subr.mxu0 0.0
    %1223 = vmatpush1.msra.mxu0 %v469
    %1224 = vmatprep.subr.mxu0 0.0
    %1225 = vmatpush1.msra.mxu0 %v470
    %1226 = vmatprep.subr.mxu0 0.0
    %1227 = vmatpush1.msra.mxu0 %v471
    %1228 = vmatprep.subr.mxu0 0.0
    %1229 = vmatpush1.msra.mxu0 %v472
    %1230 = vmatprep.subr.mxu0 0.0
    %1231 = vmatpush1.msra.mxu0 %v473
    %1232 = vmatprep.subr.mxu0 0.0
    %1233 = vmatpush1.msra.mxu0 %v474
    %1234 = vmatprep.subr.mxu0 0.0
    %1235 = vmatpush1.msra.mxu0 %v475
    %1236 = vmatprep.subr.mxu0 0.0
    %1237 = vmatpush1.msra.mxu0 %v476
    %1238 = vmatprep.subr.mxu0 0.0
    %1239 = vmatpush1.msra.mxu0 %v477
    %1240 = vmatprep.subr.mxu0 0.0
    %1241 = vmatpush1.msra.mxu0 %v478
    %1242 = vmatprep.subr.mxu0 0.0
    %1243 = vmatpush1.msra.mxu0 %v479
    %1244 = vmatprep.subr.mxu0 0.0
    %1245 = vmatpush1.msra.mxu0 %v480
    %1246 = vmatprep.subr.mxu0 0.0
    %1247 = vmatpush1.msra.mxu0 %v481
    %1248 = vmatprep.subr.mxu0 0.0
    %1249 = vmatpush1.msra.mxu0 %v482
    %1250 = vmatprep.subr.mxu0 0.0
    %1251 = vmatpush1.msra.mxu0 %v483
    %1252 = vmatprep.subr.mxu0 0.0
    %1253 = vmatpush1.msra.mxu0 %v484
    %1254 = vmatprep.subr.mxu0 0.0
    %1255 = vmatpush1.msra.mxu0 %v485
    %1256 = vmatprep.subr.mxu0 0.0
    %1257 = vmatpush1.msra.mxu0 %v486
    %1258 = vmatprep.subr.mxu0 0.0
    %1259 = vmatpush1.msra.mxu0 %v487
    %1260 = vmatprep.subr.mxu0 0.0
    %1261 = vmatpush1.msra.mxu0 %v488
    %1262 = vmatprep.subr.mxu0 0.0
    %1263 = vmatpush1.msra.mxu0 %v489
    %1264 = vmatprep.mubr.f32.mxu0 %v165
    %1265 = vmatmul.mubr.f32.gmra.mrb[0].mxu0 %v164
    %v1266 = vpop.f32.mrb[0].mxu0
    %v1267 = vadd.f32 %v1197, %v1266
    %v1268 = vpop.f32.mrb[0].mxu0
    %1269 = vdwg.mxu0
    %1270 = vmatprep.subr.mxu0 0.0
    %1271 = vmatpush1.msra.mxu0 %v490
    %1272 = vmatprep.subr.mxu0 0.0
    %1273 = vmatpush1.msra.mxu0 %v491
    %1274 = vmatprep.subr.mxu0 0.0
    %1275 = vmatpush1.msra.mxu0 %v492
    %1276 = vmatprep.subr.mxu0 0.0
    %1277 = vmatpush1.msra.mxu0 %v493
    %1278 = vmatprep.subr.mxu0 0.0
    %1279 = vmatpush1.msra.mxu0 %v494
    %1280 = vmatprep.subr.mxu0 0.0
    %1281 = vmatpush1.msra.mxu0 %v495
    %1282 = vmatprep.subr.mxu0 0.0
    %1283 = vmatpush1.msra.mxu0 %v496
    %1284 = vmatprep.subr.mxu0 0.0
    %1285 = vmatpush1.msra.mxu0 %v497
    %1286 = vmatprep.subr.mxu0 0.0
    %1287 = vmatpush1.msra.mxu0 %v498
    %1288 = vmatprep.subr.mxu0 0.0
    %1289 = vmatpush1.msra.mxu0 %v499
    %1290 = vmatprep.subr.mxu0 0.0
    %1291 = vmatpush1.msra.mxu0 %v500
    %1292 = vmatprep.subr.mxu0 0.0
    %1293 = vmatpush1.msra.mxu0 %v501
    %1294 = vmatprep.subr.mxu0 0.0
    %1295 = vmatpush1.msra.mxu0 %v502
    %1296 = vmatprep.subr.mxu0 0.0
    %1297 = vmatpush1.msra.mxu0 %v503
    %1298 = vmatprep.subr.mxu0 0.0
    %1299 = vmatpush1.msra.mxu0 %v504
    %1300 = vmatprep.subr.mxu0 0.0
    %1301 = vmatpush1.msra.mxu0 %v505
    %1302 = vmatprep.subr.mxu0 0.0
    %1303 = vmatpush1.msra.mxu0 %v506
    %1304 = vmatprep.subr.mxu0 0.0
    %1305 = vmatpush1.msra.mxu0 %v507
    %1306 = vmatprep.subr.mxu0 0.0
    %1307 = vmatpush1.msra.mxu0 %v508
    %1308 = vmatprep.subr.mxu0 0.0
    %1309 = vmatpush1.msra.mxu0 %v509
    %1310 = vmatprep.subr.mxu0 0.0
    %1311 = vmatpush1.msra.mxu0 %v510
    %1312 = vmatprep.subr.mxu0 0.0
    %1313 = vmatpush1.msra.mxu0 %v511
    %1314 = vmatprep.subr.mxu0 0.0
    %1315 = vmatpush1.msra.mxu0 %v512
    %1316 = vmatprep.subr.mxu0 0.0
    %1317 = vmatpush1.msra.mxu0 %v513
    %1318 = vmatprep.subr.mxu0 0.0
    %1319 = vmatpush1.msra.mxu0 %v514
    %1320 = vmatprep.subr.mxu0 0.0
    %1321 = vmatpush1.msra.mxu0 %v515
    %1322 = vmatprep.subr.mxu0 0.0
    %1323 = vmatpush1.msra.mxu0 %v516
    %1324 = vmatprep.subr.mxu0 0.0
    %1325 = vmatpush1.msra.mxu0 %v517
    %1326 = vmatprep.subr.mxu0 0.0
    %1327 = vmatpush1.msra.mxu0 %v518
    %1328 = vmatprep.subr.mxu0 0.0
    %1329 = vmatpush1.msra.mxu0 %v519
    %1330 = vmatprep.subr.mxu0 0.0
    %1331 = vmatpush1.msra.mxu0 %v520
    %1332 = vmatprep.subr.mxu0 0.0
    %1333 = vmatpush1.msra.mxu0 %v521
    %1334 = vmatprep.mubr.f32.mxu0 %v167
    %1335 = vmatmul.mubr.f32.gmra.mrb[0].mxu0 %v166
    %v1336 = vpop.f32.mrb[0].mxu0
    %v1337 = vadd.f32 %v1267, %v1336
    %v1338 = vpop.f32.mrb[0].mxu0
    %1339 = vdwg.mxu0
    %1340 = vmatprep.subr.mxu0 0.0
    %1341 = vmatpush1.msra.mxu0 %v522
    %1342 = vmatprep.subr.mxu0 0.0
    %1343 = vmatpush1.msra.mxu0 %v523
    %1344 = vmatprep.subr.mxu0 0.0
    %1345 = vmatpush1.msra.mxu0 %v524
    %1346 = vmatprep.subr.mxu0 0.0
    %1347 = vmatpush1.msra.mxu0 %v525
    %1348 = vmatprep.subr.mxu0 0.0
    %1349 = vmatpush1.msra.mxu0 %v526
    %1350 = vmatprep.subr.mxu0 0.0
    %1351 = vmatpush1.msra.mxu0 %v527
    %1352 = vmatprep.subr.mxu0 0.0
    %1353 = vmatpush1.msra.mxu0 %v528
    %1354 = vmatprep.subr.mxu0 0.0
    %1355 = vmatpush1.msra.mxu0 %v529
    %1356 = vmatprep.subr.mxu0 0.0
    %1357 = vmatpush1.msra.mxu0 %v530
    %1358 = vmatprep.subr.mxu0 0.0
    %1359 = vmatpush1.msra.mxu0 %v531
    %1360 = vmatprep.subr.mxu0 0.0
    %1361 = vmatpush1.msra.mxu0 %v532
    %1362 = vmatprep.subr.mxu0 0.0
    %1363 = vmatpush1.msra.mxu0 %v533
    %1364 = vmatprep.subr.mxu0 0.0
    %1365 = vmatpush1.msra.mxu0 %v534
    %1366 = vmatprep.subr.mxu0 0.0
    %1367 = vmatpush1.msra.mxu0 %v535
    %1368 = vmatprep.subr.mxu0 0.0
    %1369 = vmatpush1.msra.mxu0 %v536
    %1370 = vmatprep.subr.mxu0 0.0
    %1371 = vmatpush1.msra.mxu0 %v537
    %1372 = vmatprep.subr.mxu0 0.0
    %1373 = vmatpush1.msra.mxu0 %v538
    %1374 = vmatprep.subr.mxu0 0.0
    %1375 = vmatpush1.msra.mxu0 %v539
    %1376 = vmatprep.subr.mxu0 0.0
    %1377 = vmatpush1.msra.mxu0 %v540
    %1378 = vmatprep.subr.mxu0 0.0
    %1379 = vmatpush1.msra.mxu0 %v541
    %1380 = vmatprep.subr.mxu0 0.0
    %1381 = vmatpush1.msra.mxu0 %v542
    %1382 = vmatprep.subr.mxu0 0.0
    %1383 = vmatpush1.msra.mxu0 %v543
    %1384 = vmatprep.subr.mxu0 0.0
    %1385 = vmatpush1.msra.mxu0 %v544
    %1386 = vmatprep.subr.mxu0 0.0
    %1387 = vmatpush1.msra.mxu0 %v545
    %1388 = vmatprep.subr.mxu0 0.0
    %1389 = vmatpush1.msra.mxu0 %v546
    %1390 = vmatprep.subr.mxu0 0.0
    %1391 = vmatpush1.msra.mxu0 %v547
    %1392 = vmatprep.subr.mxu0 0.0
    %1393 = vmatpush1.msra.mxu0 %v548
    %1394 = vmatprep.subr.mxu0 0.0
    %1395 = vmatpush1.msra.mxu0 %v549
    %1396 = vmatprep.subr.mxu0 0.0
    %1397 = vmatpush1.msra.mxu0 %v550
    %1398 = vmatprep.subr.mxu0 0.0
    %1399 = vmatpush1.msra.mxu0 %v551
    %1400 = vmatprep.subr.mxu0 0.0
    %1401 = vmatpush1.msra.mxu0 %v552
    %1402 = vmatprep.subr.mxu0 0.0
    %1403 = vmatpush1.msra.mxu0 %v553
    %1404 = vmatprep.mubr.f32.mxu0 %v169
    %1405 = vmatmul.mubr.f32.gmra.mrb[0].mxu0 %v168
    %v1406 = vpop.f32.mrb[0].mxu0
    %v1407 = vadd.f32 %v1337, %v1406
    %v1408 = vpop.f32.mrb[0].mxu0
    %1409 = vdwg.mxu0
    %v1410 = vmax.f32 %v1407, 0.0
    %v1411 = vmul.f32 %v143, %v1410
    %v1412 = vmul.f32 %v152, %v1410
    %v1413 = vmul.f32 %v161, %v1410
    %v1414 = vld [vmem:[#allocation10] sm:$0xff]
    %v1415 = vld [vmem:[#allocation10 + $0x8] sm:$0xff]
    %v1416 = vld [vmem:[#allocation10 + $0x10] sm:$0xff]
    %v1417 = vld [vmem:[#allocation10 + $0x18] sm:$0xff]
    %v1418 = vld [vmem:[#allocation10 + $0x20] sm:$0xff]
    %v1419 = vld [vmem:[#allocation10 + $0x28] sm:$0xff]
    %v1420 = vld [vmem:[#allocation10 + $0x30] sm:$0xff]
    %v1421 = vld [vmem:[#allocation10 + $0x38] sm:$0xff]
    %v1422 = vld [vmem:[#allocation10 + $0x40] sm:$0xff]
    %v1423 = vld [vmem:[#allocation10 + $0x48] sm:$0xff]
    %v1424 = vld [vmem:[#allocation10 + $0x50] sm:$0xff]
    %v1425 = vld [vmem:[#allocation10 + $0x58] sm:$0xff]
    %v1426 = vld [vmem:[#allocation10 + $0x60] sm:$0xff]
    %v1427 = vld [vmem:[#allocation10 + $0x68] sm:$0xff]
    %v1428 = vld [vmem:[#allocation10 + $0x70] sm:$0xff]
    %v1429 = vld [vmem:[#allocation10 + $0x78] sm:$0xff]
    %v1430 = vld [vmem:[#allocation10 + $0x80] sm:$0xff]
    %v1431 = vld [vmem:[#allocation10 + $0x88] sm:$0xff]
    %v1432 = vld [vmem:[#allocation10 + $0x90] sm:$0xff]
    %v1433 = vld [vmem:[#allocation10 + $0x98] sm:$0xff]
    %v1434 = vld [vmem:[#allocation10 + $0xa0] sm:$0xff]
    %v1435 = vld [vmem:[#allocation10 + $0xa8] sm:$0xff]
    %v1436 = vld [vmem:[#allocation10 + $0xb0] sm:$0xff]
    %v1437 = vld [vmem:[#allocation10 + $0xb8] sm:$0xff]
    %v1438 = vld [vmem:[#allocation10 + $0xc0] sm:$0xff]
    %v1439 = vld [vmem:[#allocation10 + $0xc8] sm:$0xff]
    %v1440 = vld [vmem:[#allocation10 + $0xd0] sm:$0xff]
    %v1441 = vld [vmem:[#allocation10 + $0xd8] sm:$0xff]
    %v1442 = vld [vmem:[#allocation10 + $0xe0] sm:$0xff]
    %v1443 = vld [vmem:[#allocation10 + $0xe8] sm:$0xff]
    %v1444 = vld [vmem:[#allocation10 + $0xf0] sm:$0xff]
    %v1445 = vld [vmem:[#allocation10 + $0xf8] sm:$0xff]
    %v1446 = vld [vmem:[#allocation10 + $0x100] sm:$0xff]
    %v1447 = vld [vmem:[#allocation10 + $0x108] sm:$0xff]
    %v1448 = vld [vmem:[#allocation10 + $0x110] sm:$0xff]
    %v1449 = vld [vmem:[#allocation10 + $0x118] sm:$0xff]
    %v1450 = vld [vmem:[#allocation10 + $0x120] sm:$0xff]
    %v1451 = vld [vmem:[#allocation10 + $0x128] sm:$0xff]
    %v1452 = vld [vmem:[#allocation10 + $0x130] sm:$0xff]
    %v1453 = vld [vmem:[#allocation10 + $0x138] sm:$0xff]
    %v1454 = vld [vmem:[#allocation10 + $0x140] sm:$0xff]
    %v1455 = vld [vmem:[#allocation10 + $0x148] sm:$0xff]
    %v1456 = vld [vmem:[#allocation10 + $0x150] sm:$0xff]
    %v1457 = vld [vmem:[#allocation10 + $0x158] sm:$0xff]
    %v1458 = vld [vmem:[#allocation10 + $0x160] sm:$0xff]
    %v1459 = vld [vmem:[#allocation10 + $0x168] sm:$0xff]
    %v1460 = vld [vmem:[#allocation10 + $0x170] sm:$0xff]
    %v1461 = vld [vmem:[#allocation10 + $0x178] sm:$0xff]
    %v1462 = vld [vmem:[#allocation12] sm:$0x1]
    %v1463 = vmul.f32 %v143, %v1462
    %s1464 = scalar_lea.vmem [#allocation12], 1
    %v1465 = vld [vmem:[%s1464] sm:$0x1]
    %v1466 = vmul.f32 %v152, %v1465
    %v1467 = vadd.f32 %v1463, %v1466
    %s1468 = scalar_lea.vmem [#allocation12], 2
    %v1469 = vld [vmem:[%s1468] sm:$0x1]
    %v1470 = vmul.f32 %v161, %v1469
    %v1471 = vadd.f32 %v1467, %v1470
    %v1473 = vlaneseq
    %v1474 = vshrl.u32 %v1473, 7
    %v1475 = vsub.s32 0, %v1474
    %v1476 = vrot.slane %v1471, %v1475
    %1478 = vmatprep.subr.mxu0 0.0
    %1479 = vmatpush1.msra.mxu0 %v1414
    %1480 = vmatprep.subr.mxu0 0.0
    %1481 = vmatpush1.msra.mxu0 %v1415
    %1482 = vmatprep.subr.mxu0 0.0
    %1483 = vmatpush1.msra.mxu0 %v1416
    %1484 = vmatprep.subr.mxu0 0.0
    %1485 = vmatpush1.msra.mxu0 %v1417
    %1486 = vmatprep.subr.mxu0 0.0
    %1487 = vmatpush1.msra.mxu0 %v1418
    %1488 = vmatprep.subr.mxu0 0.0
    %1489 = vmatpush1.msra.mxu0 %v1419
    %1490 = vmatprep.subr.mxu0 0.0
    %1491 = vmatpush1.msra.mxu0 %v1420
    %1492 = vmatprep.subr.mxu0 0.0
    %1493 = vmatpush1.msra.mxu0 %v1421
    %1494 = vmatprep.subr.mxu0 0.0
    %1495 = vmatpush1.msra.mxu0 %v1422
    %1496 = vmatprep.subr.mxu0 0.0
    %1497 = vmatpush1.msra.mxu0 %v1423
    %1498 = vmatprep.subr.mxu0 0.0
    %1499 = vmatpush1.msra.mxu0 %v1424
    %1500 = vmatprep.subr.mxu0 0.0
    %1501 = vmatpush1.msra.mxu0 %v1425
    %1502 = vmatprep.subr.mxu0 0.0
    %1503 = vmatpush1.msra.mxu0 %v1426
    %1504 = vmatprep.subr.mxu0 0.0
    %1505 = vmatpush1.msra.mxu0 %v1427
    %1506 = vmatprep.subr.mxu0 0.0
    %1507 = vmatpush1.msra.mxu0 %v1428
    %1508 = vmatprep.subr.mxu0 0.0
    %1509 = vmatpush1.msra.mxu0 %v1429
    %1510 = vmatprep.subr.mxu0 0.0
    %1511 = vmatpush1.msra.mxu0 %v1430
    %1512 = vmatprep.subr.mxu0 0.0
    %1513 = vmatpush1.msra.mxu0 %v1431
    %1514 = vmatprep.subr.mxu0 0.0
    %1515 = vmatpush1.msra.mxu0 %v1432
    %1516 = vmatprep.subr.mxu0 0.0
    %1517 = vmatpush1.msra.mxu0 %v1433
    %1518 = vmatprep.subr.mxu0 0.0
    %1519 = vmatpush1.msra.mxu0 %v1434
    %1520 = vmatprep.subr.mxu0 0.0
    %1521 = vmatpush1.msra.mxu0 %v1435
    %1522 = vmatprep.subr.mxu0 0.0
    %1523 = vmatpush1.msra.mxu0 %v1436
    %1524 = vmatprep.subr.mxu0 0.0
    %1525 = vmatpush1.msra.mxu0 %v1437
    %1526 = vmatprep.subr.mxu0 0.0
    %1527 = vmatpush1.msra.mxu0 %v1438
    %1528 = vmatprep.subr.mxu0 0.0
    %1529 = vmatpush1.msra.mxu0 %v1439
    %1530 = vmatprep.subr.mxu0 0.0
    %1531 = vmatpush1.msra.mxu0 %v1440
    %1532 = vmatprep.subr.mxu0 0.0
    %1533 = vmatpush1.msra.mxu0 %v1441
    %1534 = vmatprep.subr.mxu0 0.0
    %1535 = vmatpush1.msra.mxu0 %v1442
    %1536 = vmatprep.subr.mxu0 0.0
    %1537 = vmatpush1.msra.mxu0 %v1443
    %1538 = vmatprep.subr.mxu0 0.0
    %1539 = vmatpush1.msra.mxu0 %v1444
    %1540 = vmatprep.subr.mxu0 0.0
    %1541 = vmatpush1.msra.mxu0 %v1445
    %1542 = vmatprep.mubr.f32.mxu0 %v1412
    %1543 = vmatmul.mubr.f32.gmra.mrb[0].mxu0 %v1411
    %v1544 = vpop.f32.mrb[0].mxu0
    %v1545 = vadd.f32 %v1476, %v1544
    %v1546 = vpop.f32.mrb[0].mxu0
    %1547 = vdwg.mxu0
    %1548 = vmatprep.subr.mxu0 0.0
    %1549 = vmatpush1.msra.mxu0 %v1446
    %1550 = vmatprep.subr.mxu0 0.0
    %1551 = vmatpush1.msra.mxu0 %v1447
    %1552 = vmatprep.subr.mxu0 0.0
    %1553 = vmatpush1.msra.mxu0 %v1448
    %1554 = vmatprep.subr.mxu0 0.0
    %1555 = vmatpush1.msra.mxu0 %v1449
    %1556 = vmatprep.subr.mxu0 0.0
    %1557 = vmatpush1.msra.mxu0 %v1450
    %1558 = vmatprep.subr.mxu0 0.0
    %1559 = vmatpush1.msra.mxu0 %v1451
    %1560 = vmatprep.subr.mxu0 0.0
    %1561 = vmatpush1.msra.mxu0 %v1452
    %1562 = vmatprep.subr.mxu0 0.0
    %1563 = vmatpush1.msra.mxu0 %v1453
    %1564 = vmatprep.subr.mxu0 0.0
    %1565 = vmatpush1.msra.mxu0 %v1454
    %1566 = vmatprep.subr.mxu0 0.0
    %1567 = vmatpush1.msra.mxu0 %v1455
    %1568 = vmatprep.subr.mxu0 0.0
    %1569 = vmatpush1.msra.mxu0 %v1456
    %1570 = vmatprep.subr.mxu0 0.0
    %1571 = vmatpush1.msra.mxu0 %v1457
    %1572 = vmatprep.subr.mxu0 0.0
    %1573 = vmatpush1.msra.mxu0 %v1458
    %1574 = vmatprep.subr.mxu0 0.0
    %1575 = vmatpush1.msra.mxu0 %v1459
    %1576 = vmatprep.subr.mxu0 0.0
    %1577 = vmatpush1.msra.mxu0 %v1460
    %1578 = vmatprep.subr.mxu0 0.0
    %1579 = vmatpush1.msra.mxu0 %v1461
    %1580 = vmatprep.subr.mxu0 0.0
    %1581 = vmatpush1.msra.mxu0 0.0
    %1582 = vmatprep.subr.mxu0 0.0
    %1583 = vmatpush1.msra.mxu0 0.0
    %1584 = vmatprep.subr.mxu0 0.0
    %1585 = vmatpush1.msra.mxu0 0.0
    %1586 = vmatprep.subr.mxu0 0.0
    %1587 = vmatpush1.msra.mxu0 0.0
    %1588 = vmatprep.subr.mxu0 0.0
    %1589 = vmatpush1.msra.mxu0 0.0
    %1590 = vmatprep.subr.mxu0 0.0
    %1591 = vmatpush1.msra.mxu0 0.0
    %1592 = vmatprep.subr.mxu0 0.0
    %1593 = vmatpush1.msra.mxu0 0.0
    %1594 = vmatprep.subr.mxu0 0.0
    %1595 = vmatpush1.msra.mxu0 0.0
    %1596 = vmatprep.subr.mxu0 0.0
    %1597 = vmatpush1.msra.mxu0 0.0
    %1598 = vmatprep.subr.mxu0 0.0
    %1599 = vmatpush1.msra.mxu0 0.0
    %1600 = vmatprep.subr.mxu0 0.0
    %1601 = vmatpush1.msra.mxu0 0.0
    %1602 = vmatprep.subr.mxu0 0.0
    %1603 = vmatpush1.msra.mxu0 0.0
    %1604 = vmatprep.subr.mxu0 0.0
    %1605 = vmatpush1.msra.mxu0 0.0
    %1606 = vmatprep.subr.mxu0 0.0
    %1607 = vmatpush1.msra.mxu0 0.0
    %1608 = vmatprep.subr.mxu0 0.0
    %1609 = vmatpush1.msra.mxu0 0.0
    %1610 = vmatprep.subr.mxu0 0.0
    %1611 = vmatpush1.msra.mxu0 0.0
    %1612 = vmatprep.mubr.f32.mxu0 0.0
    %1613 = vmatmul.mubr.f32.gmra.mrb[0].mxu0 %v1413
    %v1614 = vpop.f32.mrb[0].mxu0
    %v1615 = vadd.f32 %v1545, %v1614
    %v1616 = vpop.f32.mrb[0].mxu0
    %1617 = vdwg.mxu0
    %v1618 = vld [vmem:[#allocation13] sm:$0xff]
    %v1619 = vld [vmem:[#allocation13 + $0x8] sm:$0xff]
    %v1620 = vld [vmem:[#allocation13 + $0x10] sm:$0xff]
    %v1621 = vld [vmem:[#allocation13 + $0x18] sm:$0xff]
    %v1622 = vld [vmem:[#allocation13 + $0x20] sm:$0xff]
    %v1623 = vld [vmem:[#allocation13 + $0x28] sm:$0xff]
    %v1624 = vld [vmem:[#allocation13 + $0x30] sm:$0xff]
    %v1625 = vld [vmem:[#allocation13 + $0x38] sm:$0xff]
    %v1626 = vld [vmem:[#allocation13 + $0x40] sm:$0xff]
    %v1627 = vld [vmem:[#allocation13 + $0x48] sm:$0xff]
    %v1628 = vld [vmem:[#allocation13 + $0x50] sm:$0xff]
    %v1629 = vld [vmem:[#allocation13 + $0x58] sm:$0xff]
    %v1630 = vld [vmem:[#allocation13 + $0x60] sm:$0xff]
    %v1631 = vld [vmem:[#allocation13 + $0x68] sm:$0xff]
    %v1632 = vld [vmem:[#allocation13 + $0x70] sm:$0xff]
    %v1633 = vld [vmem:[#allocation13 + $0x78] sm:$0xff]
    %v1634 = vld [vmem:[#allocation13 + $0x80] sm:$0xff]
    %v1635 = vld [vmem:[#allocation13 + $0x88] sm:$0xff]
    %v1636 = vld [vmem:[#allocation13 + $0x90] sm:$0xff]
    %v1637 = vld [vmem:[#allocation13 + $0x98] sm:$0xff]
    %v1638 = vld [vmem:[#allocation13 + $0xa0] sm:$0xff]
    %v1639 = vld [vmem:[#allocation13 + $0xa8] sm:$0xff]
    %v1640 = vld [vmem:[#allocation13 + $0xb0] sm:$0xff]
    %v1641 = vld [vmem:[#allocation13 + $0xb8] sm:$0xff]
    %v1642 = vld [vmem:[#allocation13 + $0xc0] sm:$0xff]
    %v1643 = vld [vmem:[#allocation13 + $0xc8] sm:$0xff]
    %v1644 = vld [vmem:[#allocation13 + $0xd0] sm:$0xff]
    %v1645 = vld [vmem:[#allocation13 + $0xd8] sm:$0xff]
    %v1646 = vld [vmem:[#allocation13 + $0xe0] sm:$0xff]
    %v1647 = vld [vmem:[#allocation13 + $0xe8] sm:$0xff]
    %v1648 = vld [vmem:[#allocation13 + $0xf0] sm:$0xff]
    %v1649 = vld [vmem:[#allocation13 + $0xf8] sm:$0xff]
    %v1650 = vld [vmem:[#allocation15] sm:$0x3]
    %v1652 = vlaneseq
    %v1653 = vshrl.u32 %v1652, 7
    %v1654 = vsub.s32 0, %v1653
    %v1655 = vrot.slane %v1650, %v1654
    %v1656 = vlaneseq
    %v1657 = vshrl.u32 %v1656, 7
    %v1658 = vsub.s32 1, %v1657
    %v1659 = vrot.slane %v1650, %v1658
    %1662 = vmatprep.subr.mxu0 %v1619
    %1663 = vmatpush1.msra.mxu0 %v1618
    %1664 = vmatprep.subr.mxu0 %v1621
    %1665 = vmatpush1.msra.mxu0 %v1620
    %1666 = vmatprep.subr.mxu0 %v1623
    %1667 = vmatpush1.msra.mxu0 %v1622
    %1668 = vmatprep.subr.mxu0 %v1625
    %1669 = vmatpush1.msra.mxu0 %v1624
    %1670 = vmatprep.subr.mxu0 %v1627
    %1671 = vmatpush1.msra.mxu0 %v1626
    %1672 = vmatprep.subr.mxu0 %v1629
    %1673 = vmatpush1.msra.mxu0 %v1628
    %1674 = vmatprep.subr.mxu0 %v1631
    %1675 = vmatpush1.msra.mxu0 %v1630
    %1676 = vmatprep.subr.mxu0 %v1633
    %1677 = vmatpush1.msra.mxu0 %v1632
    %1678 = vmatprep.subr.mxu0 %v1635
    %1679 = vmatpush1.msra.mxu0 %v1634
    %1680 = vmatprep.subr.mxu0 %v1637
    %1681 = vmatpush1.msra.mxu0 %v1636
    %1682 = vmatprep.subr.mxu0 %v1639
    %1683 = vmatpush1.msra.mxu0 %v1638
    %1684 = vmatprep.subr.mxu0 %v1641
    %1685 = vmatpush1.msra.mxu0 %v1640
    %1686 = vmatprep.subr.mxu0 %v1643
    %1687 = vmatpush1.msra.mxu0 %v1642
    %1688 = vmatprep.subr.mxu0 %v1645
    %1689 = vmatpush1.msra.mxu0 %v1644
    %1690 = vmatprep.subr.mxu0 %v1647
    %1691 = vmatpush1.msra.mxu0 %v1646
    %1692 = vmatprep.subr.mxu0 %v1649
    %1693 = vmatpush1.msra.mxu0 %v1648
    %1694 = vmatprep.subr.mxu0 0.0
    %1695 = vmatpush1.msra.mxu0 0.0
    %1696 = vmatprep.subr.mxu0 0.0
    %1697 = vmatpush1.msra.mxu0 0.0
    %1698 = vmatprep.subr.mxu0 0.0
    %1699 = vmatpush1.msra.mxu0 0.0
    %1700 = vmatprep.subr.mxu0 0.0
    %1701 = vmatpush1.msra.mxu0 0.0
    %1702 = vmatprep.subr.mxu0 0.0
    %1703 = vmatpush1.msra.mxu0 0.0
    %1704 = vmatprep.subr.mxu0 0.0
    %1705 = vmatpush1.msra.mxu0 0.0
    %1706 = vmatprep.subr.mxu0 0.0
    %1707 = vmatpush1.msra.mxu0 0.0
    %1708 = vmatprep.subr.mxu0 0.0
    %1709 = vmatpush1.msra.mxu0 0.0
    %1710 = vmatprep.subr.mxu0 0.0
    %1711 = vmatpush1.msra.mxu0 0.0
    %1712 = vmatprep.subr.mxu0 0.0
    %1713 = vmatpush1.msra.mxu0 0.0
    %1714 = vmatprep.subr.mxu0 0.0
    %1715 = vmatpush1.msra.mxu0 0.0
    %1716 = vmatprep.subr.mxu0 0.0
    %1717 = vmatpush1.msra.mxu0 0.0
    %1718 = vmatprep.subr.mxu0 0.0
    %1719 = vmatpush1.msra.mxu0 0.0
    %1720 = vmatprep.subr.mxu0 0.0
    %1721 = vmatpush1.msra.mxu0 0.0
    %1722 = vmatprep.subr.mxu0 0.0
    %1723 = vmatpush1.msra.mxu0 0.0
    %1724 = vmatprep.subr.mxu0 0.0
    %1725 = vmatpush1.msra.mxu0 0.0
    %1726 = vmatprep.mubr.f32.mxu0 0.0
    %1727 = vmatmul.mubr.f32.gmra.mrb[0].mxu0 %v1615
    %v1728 = vpop.f32.mrb[0].mxu0
    %v1729 = vadd.f32 %v1655, %v1728
    %v1730 = vpop.f32.mrb[0].mxu0
    %v1731 = vadd.f32 %v1659, %v1730
    %1732 = vdwg.mxu0
    %1733 = vst [vmem:[#allocation16] sm:$0xff] %v1729
    %1734 = vst [vmem:[#allocation16 + $0x8] sm:$0xff] %v1731
    // Predicated region
    $region66: #{tpu_custom_call.1} parent=1 // pred_check
      _
    $region67: #{tpu_custom_call.1} parent=1 // pred_check_branch
      %1736 = sbr.rel (0) target = $region69
    $region68: #{tpu_custom_call.1} parent=1 // pred_region
      %s1738 = ssub.s32 256, 256
      %1739 = vsyncadd [#allocation4], %s1738
      %s1741 = sshll.u32 [#allocation16], 4
      %s1742 = int_to_ptr.vmem [resolvable:$true] %s1741
      %1744 = dma.vmem_to_hbm [thread:$0]  %s1742, 256, %s8, [#allocation4]
    $region69: #{tpu_custom_call.1} parent=1 // pred_fallthru
      _
    // Predicated region
    $region70: #{tpu_custom_call.1} parent=1 // pred_check
      _
    $region71: #{tpu_custom_call.1} parent=1 // pred_check_branch
      %1746 = sbr.rel (0) target = $region73
    $region72: #{tpu_custom_call.1} parent=1 // pred_region
      %1747 = dma.done [#allocation4], 256
    $region73: #{tpu_custom_call.1} parent=1 // pred_fallthru
      _
    %1748 = vsyncpa [#allocation3], 1
    %1749 = vsyncpa [#allocation8], 1
    %1750 = vsyncpa [#allocation11], 1
    %1751 = vsyncpa [#allocation14], 1
    %1752 = vsyncpa [#allocation4], 1
    %1753 = vsyncpa [#allocation5], 1

</llo_original>
